<compile_context>
chip_gen: v6e
topology: v6e:2x2x1
jax: 0.10.0
libtpu: 0.0.40
codegen_flags: <defaults>
</compile_context>

<pallas_src>
import functools

import jax
import jax.numpy as jnp
from jax.experimental import pallas as pl
from jax.experimental.pallas import tpu as pltpu


# ----------------------------------------------------------------------------
# Pallas kernel: full forward pass (encoder LSTM -> fc_end -> decode loop).
# Everything is flattened time-major: rows [t*B : (t+1)*B] belong to step t.
# ----------------------------------------------------------------------------
def occ_lstm_kernel(x_ref, yf_ref, wih_ref, whh_ref, b_ref, wfc_ref, bfc_ref,
                    out_ref, *, T_x, T_y, B):
    # x_ref  : (T_x*B, x_size)   flattened time-major encoder input
    # yf_ref : (T_y*B, F)        flattened time-major decoder features
    # wih_ref: (x_size, 4H)      LSTM input weights (transposed, gate order i,f,g,o)
    # whh_ref: (H, 4H)           LSTM recurrent weights (transposed)
    # b_ref  : (1, 4H)           b_ih + b_hh
    # wfc_ref: (H, Y)            fc_end weight (transposed)
    # bfc_ref: (1, Y)            fc_end bias
    # out_ref: (T_y*B, Y)        predictions (flattened time-major)
    wih = wih_ref[...]
    whh = whh_ref[...]
    b = b_ref[...]
    wfc = wfc_ref[...]
    bfc = bfc_ref[...]

    H = whh.shape[0]
    Y = wfc.shape[1]

    # ---- hoisted input projections (outside the serial recurrence) ---------
    # Encoder: one dense (T_x*B, x_size) @ (x_size, 4H) matmul, bias fused in.
    gx_enc = jnp.dot(x_ref[...], wih, preferred_element_type=jnp.float32) + b
    # Decoder features: only the y_prev contribution stays in the loop.
    wih_y = wih[:Y, :]   # (Y, 4H)  rows multiplying the fed-back prediction
    wih_f = wih[Y:, :]   # (F, 4H)  rows multiplying y_features
    gx_dec = jnp.dot(yf_ref[...], wih_f, preferred_element_type=jnp.float32) + b

    def cell(gx, h, c):
        # gx already contains input projection + bias; only recurrent matmul
        # and elementwise gate math sit on the serial chain.
        gates = gx + jnp.dot(h, whh, preferred_element_type=jnp.float32)  # (B, 4H)
        sig = jax.nn.sigmoid(gates)   # one full-vreg EUP pass: i, f, -, o
        tnh = jnp.tanh(gates)         # one full-vreg EUP pass: -, -, g, -
        i = sig[:, 0 * H:1 * H]
        f = sig[:, 1 * H:2 * H]
        g = tnh[:, 2 * H:3 * H]
        o = sig[:, 3 * H:4 * H]
        c_new = f * c + i * g
        h_new = o * jnp.tanh(c_new)
        return h_new, c_new

    h = jnp.zeros((B, H), jnp.float32)
    c = jnp.zeros((B, H), jnp.float32)

    # ---- encoder recurrence (fully unrolled; static slices, sublane-aligned)
    for t in range(T_x):
        h, c = cell(gx_enc[t * B:(t + 1) * B, :], h, c)

    # ---- y_t = fc_end(out[:, -1, :]) ---------------------------------------
    y_t = jnp.dot(h, wfc, preferred_element_type=jnp.float32) + bfc  # (B, Y)

    # ---- autoregressive decode loop (fully unrolled) ------------------------
    for t in range(T_y):
        if Y == 1:
            # (B,1) * (1,4H) broadcast: rank-1 update on the VPU, keeps the
            # MXU push off the per-step critical path.
            gy = y_t * wih_y
        else:
            gy = jnp.dot(y_t, wih_y, preferred_element_type=jnp.float32)
        h, c = cell(gx_dec[t * B:(t + 1) * B, :] + gy, h, c)
        y_t = jnp.dot(h, wfc, preferred_element_type=jnp.float32) + bfc
        out_ref[t * B:(t + 1) * B, :] = y_t   # direct static store, no carry


# ----------------------------------------------------------------------------
# Wrapper: parameter plumbing, batch padding to sublane multiple, pallas_call.
# ----------------------------------------------------------------------------
@jax.jit
def simple_occ_lstm_forward(x, y_features, params):
    """x: (B, T_x, x_size), y_features: (B, T_y, F). Returns (B, T_y) for y_size=1."""
    W_ih, W_hh, b_ih, b_hh, W_fc, b_fc = (params["W_ih"], params["W_hh"],
                                          params["b_ih"], params["b_hh"],
                                          params["W_fc"], params["b_fc"])
    B, T_x, x_size = x.shape
    _, T_y, F = y_features.shape
    Y = W_fc.shape[0]

    # Fill vreg sublanes: pad batch up to a multiple of 8 (zero rows are
    # harmless, sliced off below). Per-step latency is unchanged up to B=8.
    B_pad = max(8, ((B + 7) // 8) * 8)
    pad = B_pad - B
    x_p = jnp.pad(x.astype(jnp.float32), ((0, pad), (0, 0), (0, 0)))
    yf_p = jnp.pad(y_features.astype(jnp.float32), ((0, pad), (0, 0), (0, 0)))

    # Time-major, then flatten (time, batch) so each step is a contiguous,
    # sublane-aligned block of 8*k rows.
    x_2d = jnp.transpose(x_p, (1, 0, 2)).reshape(T_x * B_pad, x_size)
    yf_2d = jnp.transpose(yf_p, (1, 0, 2)).reshape(T_y * B_pad, F)

    wih_t = W_ih.T.astype(jnp.float32)            # (x_size, 4H)
    whh_t = W_hh.T.astype(jnp.float32)            # (H, 4H)
    b = (b_ih + b_hh)[None, :].astype(jnp.float32)  # (1, 4H)
    wfc_t = W_fc.T.astype(jnp.float32)            # (H, Y)
    bfc = b_fc[None, :].astype(jnp.float32)       # (1, Y)

    kernel = functools.partial(occ_lstm_kernel, T_x=T_x, T_y=T_y, B=B_pad)
    vmem = pl.BlockSpec(memory_space=pltpu.MemorySpace.VMEM)
    out = pl.pallas_call(
        kernel,
        out_shape=jax.ShapeDtypeStruct((T_y * B_pad, Y), jnp.float32),
        in_specs=[vmem] * 7,
        out_specs=vmem,
    )(x_2d, yf_2d, wih_t, whh_t, b, wfc_t, bfc)

    pred = out.reshape(T_y, B_pad, Y)[:, :B, :]   # drop batch padding
    pred = jnp.transpose(pred, (1, 0, 2))         # (B, T_y, Y)
    if Y == 1:                                    # torch .squeeze(-1)
        pred = jnp.squeeze(pred, -1)
    return pred


# ----------------------------------------------------------------------------
# Pure-JAX reference (same math) for correctness checking.
# ----------------------------------------------------------------------------
def reference_forward(x, y_features, params):
    W_ih, W_hh, b_ih, b_hh, W_fc, b_fc = (params["W_ih"], params["W_hh"],
                                          params["b_ih"], params["b_hh"],
                                          params["W_fc"], params["b_fc"])
    H = W_hh.shape[1]
    B = x.shape[0]
    Y = W_fc.shape[0]

    def cell(x_t, h, c):
        gates = x_t @ W_ih.T + b_ih + h @ W_hh.T + b_hh
        i = jax.nn.sigmoid(gates[:, 0 * H:1 * H])
        f = jax.nn.sigmoid(gates[:, 1 * H:2 * H])
        g = jnp.tanh(gates[:, 2 * H:3 * H])
        o = jax.nn.sigmoid(gates[:, 3 * H:4 * H])
        c = f * c + i * g
        h = o * jnp.tanh(c)
        return h, c

    h = jnp.zeros((B, H), jnp.float32)
    c = jnp.zeros((B, H), jnp.float32)
    for t in range(x.shape[1]):
        h, c = cell(x[:, t, :], h, c)
    y_t = h @ W_fc.T + b_fc
    preds = []
    for i in range(y_features.shape[1]):
        y_in = jnp.concatenate([y_t, y_features[:, i, :]], axis=-1)
        h, c = cell(y_in, h, c)
        y_t = h @ W_fc.T + b_fc
        preds.append(y_t)
    out = jnp.stack(preds, axis=1)  # (B, T_y, Y)
    return jnp.squeeze(out, -1) if Y == 1 else out


if __name__ == "__main__":
    # Hyperparameters (small, consistent with the module's forward pass).
    B, T_x, T_y = 2, 8, 4
    y_size, y_feat_size = 1, 3
    x_size = y_size + y_feat_size       # decoder feeds cat(y_t, y_feat) back
    H = 32

    key = jax.random.PRNGKey(0)
    ks = jax.random.split(key, 8)
    s = 1.0 / jnp.sqrt(H)
    params = {
        "W_ih": jax.random.uniform(ks[0], (4 * H, x_size), jnp.float32, -s, s),
        "W_hh": jax.random.uniform(ks[1], (4 * H, H), jnp.float32, -s, s),
        "b_ih": jax.random.uniform(ks[2], (4 * H,), jnp.float32, -s, s),
        "b_hh": jax.random.uniform(ks[3], (4 * H,), jnp.float32, -s, s),
        "W_fc": jax.random.uniform(ks[4], (y_size, H), jnp.float32, -s, s),
        "b_fc": jax.random.uniform(ks[5], (y_size,), jnp.float32, -s, s),
    }

    x = jax.random.normal(ks[6], (B, T_x, x_size), jnp.float32)
    y_features = jax.random.normal(ks[7], (B, T_y, y_feat_size), jnp.float32)

    pred = simple_occ_lstm_forward(x, y_features, params)
    pred = jax.block_until_ready(pred)

    ref = reference_forward(x, y_features, params)
    assert pred.shape == (B, T_y), pred.shape
    assert jnp.allclose(pred, ref, atol=1e-4, rtol=1e-4), (pred, ref)
    print("KERNEL_OK")
</pallas_src>

<mosaic_0001>
module attributes {stable_mosaic.version = 11 : i64} {
  func.func @occ_lstm_kernel(%arg0: memref<64x4xf32, #tpu.memory_space<vmem>>, %arg1: memref<32x3xf32, #tpu.memory_space<vmem>>, %arg2: memref<4x128xf32, #tpu.memory_space<vmem>>, %arg3: memref<32x128xf32, #tpu.memory_space<vmem>>, %arg4: memref<1x128xf32, #tpu.memory_space<vmem>>, %arg5: memref<32x1xf32, #tpu.memory_space<vmem>>, %arg6: memref<1x1xf32, #tpu.memory_space<vmem>>, %arg7: memref<32x1xf32, #tpu.memory_space<vmem>>) attributes {dimension_semantics = [], scalar_prefetch = 0 : i64, scratch_operands = 0 : i64, tpu.core_type = #tpu.core_type<tc>} {
    %c0 = arith.constant 0 : index
    %c0_0 = arith.constant 0 : index
    %0 = vector.load %arg2[%c0, %c0_0] : memref<4x128xf32, #tpu.memory_space<vmem>>, vector<4x128xf32>
    %c0_1 = arith.constant 0 : index
    %c0_2 = arith.constant 0 : index
    %1 = vector.load %arg3[%c0_1, %c0_2] : memref<32x128xf32, #tpu.memory_space<vmem>>, vector<32x128xf32>
    %c0_3 = arith.constant 0 : index
    %c0_4 = arith.constant 0 : index
    %2 = vector.load %arg4[%c0_3, %c0_4] : memref<1x128xf32, #tpu.memory_space<vmem>>, vector<1x128xf32>
    %c0_5 = arith.constant 0 : index
    %c0_6 = arith.constant 0 : index
    %3 = vector.load %arg5[%c0_5, %c0_6] : memref<32x1xf32, #tpu.memory_space<vmem>>, vector<32x1xf32>
    %c0_7 = arith.constant 0 : index
    %c0_8 = arith.constant 0 : index
    %4 = vector.load %arg6[%c0_7, %c0_8] : memref<1x1xf32, #tpu.memory_space<vmem>>, vector<1x1xf32>
    %c0_9 = arith.constant 0 : index
    %c0_10 = arith.constant 0 : index
    %5 = vector.load %arg0[%c0_9, %c0_10] : memref<64x4xf32, #tpu.memory_space<vmem>>, vector<64x4xf32>
    %cst = arith.constant dense<0.000000e+00> : vector<64x128xf32>
    %6 = tpu.matmul %5, %0, %cst {dimension_numbers = #tpu.dot_dimension_numbers<[1], [0], [0], [1], [0, 0, 1, 1], [], []>} : vector<64x4xf32>, vector<4x128xf32>, vector<64x128xf32> -> vector<64x128xf32>
    %7 = vector.broadcast %2 : vector<1x128xf32> to vector<64x128xf32>
    %8 = arith.addf %6, %7 : vector<64x128xf32>
    %9 = vector.extract_strided_slice %0 {offsets = [0, 0], sizes = [1, 128], strides = [1, 1]} : vector<4x128xf32> to vector<1x128xf32>
    %10 = vector.extract_strided_slice %0 {offsets = [1, 0], sizes = [3, 128], strides = [1, 1]} : vector<4x128xf32> to vector<3x128xf32>
    %c0_11 = arith.constant 0 : index
    %c0_12 = arith.constant 0 : index
    %11 = vector.load %arg1[%c0_11, %c0_12] : memref<32x3xf32, #tpu.memory_space<vmem>>, vector<32x3xf32>
    %cst_13 = arith.constant dense<0.000000e+00> : vector<32x128xf32>
    %12 = tpu.matmul %11, %10, %cst_13 {dimension_numbers = #tpu.dot_dimension_numbers<[1], [0], [0], [1], [0, 0, 1, 1], [], []>} : vector<32x3xf32>, vector<3x128xf32>, vector<32x128xf32> -> vector<32x128xf32>
    %13 = vector.broadcast %2 : vector<1x128xf32> to vector<32x128xf32>
    %14 = arith.addf %12, %13 : vector<32x128xf32>
    %cst_14 = arith.constant 0.000000e+00 : f32
    %15 = vector.broadcast %cst_14 : f32 to vector<8x32xf32>
    %cst_15 = arith.constant 0.000000e+00 : f32
    %16 = vector.broadcast %cst_15 : f32 to vector<8x32xf32>
    %17 = vector.extract_strided_slice %8 {offsets = [0, 0], sizes = [8, 128], strides = [1, 1]} : vector<64x128xf32> to vector<8x128xf32>
    %cst_16 = arith.constant dense<0.000000e+00> : vector<8x128xf32>
    %18 = tpu.matmul %15, %1, %cst_16 {dimension_numbers = #tpu.dot_dimension_numbers<[1], [0], [0], [1], [0, 0, 1, 1], [], []>} : vector<8x32xf32>, vector<32x128xf32>, vector<8x128xf32> -> vector<8x128xf32>
    %19 = arith.addf %17, %18 : vector<8x128xf32>
    %20 = arith.negf %19 : vector<8x128xf32>
    %21 = math.exp %20 : vector<8x128xf32>
    %cst_17 = arith.constant 1.000000e+00 : f32
    %22 = vector.broadcast %cst_17 : f32 to vector<8x128xf32>
    %23 = arith.addf %22, %21 : vector<8x128xf32>
    %24 = arith.divf %22, %23 : vector<8x128xf32>
    %25 = math.tanh %19 : vector<8x128xf32>
    %26 = vector.extract_strided_slice %24 {offsets = [0, 0], sizes = [8, 32], strides = [1, 1]} : vector<8x128xf32> to vector<8x32xf32>
    %27 = vector.extract_strided_slice %24 {offsets = [0, 32], sizes = [8, 32], strides = [1, 1]} : vector<8x128xf32> to vector<8x32xf32>
    %28 = vector.extract_strided_slice %25 {offsets = [0, 64], sizes = [8, 32], strides = [1, 1]} : vector<8x128xf32> to vector<8x32xf32>
    %29 = vector.extract_strided_slice %24 {offsets = [0, 96], sizes = [8, 32], strides = [1, 1]} : vector<8x128xf32> to vector<8x32xf32>
    %30 = arith.mulf %27, %16 : vector<8x32xf32>
    %31 = arith.mulf %26, %28 : vector<8x32xf32>
    %32 = arith.addf %30, %31 : vector<8x32xf32>
    %33 = math.tanh %32 : vector<8x32xf32>
    %34 = arith.mulf %29, %33 : vector<8x32xf32>
    %35 = vector.extract_strided_slice %8 {offsets = [8, 0], sizes = [8, 128], strides = [1, 1]} : vector<64x128xf32> to vector<8x128xf32>
    %cst_18 = arith.constant dense<0.000000e+00> : vector<8x128xf32>
    %36 = tpu.matmul %34, %1, %cst_18 {dimension_numbers = #tpu.dot_dimension_numbers<[1], [0], [0], [1], [0, 0, 1, 1], [], []>} : vector<8x32xf32>, vector<32x128xf32>, vector<8x128xf32> -> vector<8x128xf32>
    %37 = arith.addf %35, %36 : vector<8x128xf32>
    %38 = arith.negf %37 : vector<8x128xf32>
    %39 = math.exp %38 : vector<8x128xf32>
    %cst_19 = arith.constant 1.000000e+00 : f32
    %40 = vector.broadcast %cst_19 : f32 to vector<8x128xf32>
    %41 = arith.addf %40, %39 : vector<8x128xf32>
    %42 = arith.divf %40, %41 : vector<8x128xf32>
    %43 = math.tanh %37 : vector<8x128xf32>
    %44 = vector.extract_strided_slice %42 {offsets = [0, 0], sizes = [8, 32], strides = [1, 1]} : vector<8x128xf32> to vector<8x32xf32>
    %45 = vector.extract_strided_slice %42 {offsets = [0, 32], sizes = [8, 32], strides = [1, 1]} : vector<8x128xf32> to vector<8x32xf32>
    %46 = vector.extract_strided_slice %43 {offsets = [0, 64], sizes = [8, 32], strides = [1, 1]} : vector<8x128xf32> to vector<8x32xf32>
    %47 = vector.extract_strided_slice %42 {offsets = [0, 96], sizes = [8, 32], strides = [1, 1]} : vector<8x128xf32> to vector<8x32xf32>
    %48 = arith.mulf %45, %32 : vector<8x32xf32>
    %49 = arith.mulf %44, %46 : vector<8x32xf32>
    %50 = arith.addf %48, %49 : vector<8x32xf32>
    %51 = math.tanh %50 : vector<8x32xf32>
    %52 = arith.mulf %47, %51 : vector<8x32xf32>
    %53 = vector.extract_strided_slice %8 {offsets = [16, 0], sizes = [8, 128], strides = [1, 1]} : vector<64x128xf32> to vector<8x128xf32>
    %cst_20 = arith.constant dense<0.000000e+00> : vector<8x128xf32>
    %54 = tpu.matmul %52, %1, %cst_20 {dimension_numbers = #tpu.dot_dimension_numbers<[1], [0], [0], [1], [0, 0, 1, 1], [], []>} : vector<8x32xf32>, vector<32x128xf32>, vector<8x128xf32> -> vector<8x128xf32>
    %55 = arith.addf %53, %54 : vector<8x128xf32>
    %56 = arith.negf %55 : vector<8x128xf32>
    %57 = math.exp %56 : vector<8x128xf32>
    %cst_21 = arith.constant 1.000000e+00 : f32
    %58 = vector.broadcast %cst_21 : f32 to vector<8x128xf32>
    %59 = arith.addf %58, %57 : vector<8x128xf32>
    %60 = arith.divf %58, %59 : vector<8x128xf32>
    %61 = math.tanh %55 : vector<8x128xf32>
    %62 = vector.extract_strided_slice %60 {offsets = [0, 0], sizes = [8, 32], strides = [1, 1]} : vector<8x128xf32> to vector<8x32xf32>
    %63 = vector.extract_strided_slice %60 {offsets = [0, 32], sizes = [8, 32], strides = [1, 1]} : vector<8x128xf32> to vector<8x32xf32>
    %64 = vector.extract_strided_slice %61 {offsets = [0, 64], sizes = [8, 32], strides = [1, 1]} : vector<8x128xf32> to vector<8x32xf32>
    %65 = vector.extract_strided_slice %60 {offsets = [0, 96], sizes = [8, 32], strides = [1, 1]} : vector<8x128xf32> to vector<8x32xf32>
    %66 = arith.mulf %63, %50 : vector<8x32xf32>
    %67 = arith.mulf %62, %64 : vector<8x32xf32>
    %68 = arith.addf %66, %67 : vector<8x32xf32>
    %69 = math.tanh %68 : vector<8x32xf32>
    %70 = arith.mulf %65, %69 : vector<8x32xf32>
    %71 = vector.extract_strided_slice %8 {offsets = [24, 0], sizes = [8, 128], strides = [1, 1]} : vector<64x128xf32> to vector<8x128xf32>
    %cst_22 = arith.constant dense<0.000000e+00> : vector<8x128xf32>
    %72 = tpu.matmul %70, %1, %cst_22 {dimension_numbers = #tpu.dot_dimension_numbers<[1], [0], [0], [1], [0, 0, 1, 1], [], []>} : vector<8x32xf32>, vector<32x128xf32>, vector<8x128xf32> -> vector<8x128xf32>
    %73 = arith.addf %71, %72 : vector<8x128xf32>
    %74 = arith.negf %73 : vector<8x128xf32>
    %75 = math.exp %74 : vector<8x128xf32>
    %cst_23 = arith.constant 1.000000e+00 : f32
    %76 = vector.broadcast %cst_23 : f32 to vector<8x128xf32>
    %77 = arith.addf %76, %75 : vector<8x128xf32>
    %78 = arith.divf %76, %77 : vector<8x128xf32>
    %79 = math.tanh %73 : vector<8x128xf32>
    %80 = vector.extract_strided_slice %78 {offsets = [0, 0], sizes = [8, 32], strides = [1, 1]} : vector<8x128xf32> to vector<8x32xf32>
    %81 = vector.extract_strided_slice %78 {offsets = [0, 32], sizes = [8, 32], strides = [1, 1]} : vector<8x128xf32> to vector<8x32xf32>
    %82 = vector.extract_strided_slice %79 {offsets = [0, 64], sizes = [8, 32], strides = [1, 1]} : vector<8x128xf32> to vector<8x32xf32>
    %83 = vector.extract_strided_slice %78 {offsets = [0, 96], sizes = [8, 32], strides = [1, 1]} : vector<8x128xf32> to vector<8x32xf32>
    %84 = arith.mulf %81, %68 : vector<8x32xf32>
    %85 = arith.mulf %80, %82 : vector<8x32xf32>
    %86 = arith.addf %84, %85 : vector<8x32xf32>
    %87 = math.tanh %86 : vector<8x32xf32>
    %88 = arith.mulf %83, %87 : vector<8x32xf32>
    %89 = vector.extract_strided_slice %8 {offsets = [32, 0], sizes = [8, 128], strides = [1, 1]} : vector<64x128xf32> to vector<8x128xf32>
    %cst_24 = arith.constant dense<0.000000e+00> : vector<8x128xf32>
    %90 = tpu.matmul %88, %1, %cst_24 {dimension_numbers = #tpu.dot_dimension_numbers<[1], [0], [0], [1], [0, 0, 1, 1], [], []>} : vector<8x32xf32>, vector<32x128xf32>, vector<8x128xf32> -> vector<8x128xf32>
    %91 = arith.addf %89, %90 : vector<8x128xf32>
    %92 = arith.negf %91 : vector<8x128xf32>
    %93 = math.exp %92 : vector<8x128xf32>
    %cst_25 = arith.constant 1.000000e+00 : f32
    %94 = vector.broadcast %cst_25 : f32 to vector<8x128xf32>
    %95 = arith.addf %94, %93 : vector<8x128xf32>
    %96 = arith.divf %94, %95 : vector<8x128xf32>
    %97 = math.tanh %91 : vector<8x128xf32>
    %98 = vector.extract_strided_slice %96 {offsets = [0, 0], sizes = [8, 32], strides = [1, 1]} : vector<8x128xf32> to vector<8x32xf32>
    %99 = vector.extract_strided_slice %96 {offsets = [0, 32], sizes = [8, 32], strides = [1, 1]} : vector<8x128xf32> to vector<8x32xf32>
    %100 = vector.extract_strided_slice %97 {offsets = [0, 64], sizes = [8, 32], strides = [1, 1]} : vector<8x128xf32> to vector<8x32xf32>
    %101 = vector.extract_strided_slice %96 {offsets = [0, 96], sizes = [8, 32], strides = [1, 1]} : vector<8x128xf32> to vector<8x32xf32>
    %102 = arith.mulf %99, %86 : vector<8x32xf32>
    %103 = arith.mulf %98, %100 : vector<8x32xf32>
    %104 = arith.addf %102, %103 : vector<8x32xf32>
    %105 = math.tanh %104 : vector<8x32xf32>
    %106 = arith.mulf %101, %105 : vector<8x32xf32>
    %107 = vector.extract_strided_slice %8 {offsets = [40, 0], sizes = [8, 128], strides = [1, 1]} : vector<64x128xf32> to vector<8x128xf32>
    %cst_26 = arith.constant dense<0.000000e+00> : vector<8x128xf32>
    %108 = tpu.matmul %106, %1, %cst_26 {dimension_numbers = #tpu.dot_dimension_numbers<[1], [0], [0], [1], [0, 0, 1, 1], [], []>} : vector<8x32xf32>, vector<32x128xf32>, vector<8x128xf32> -> vector<8x128xf32>
    %109 = arith.addf %107, %108 : vector<8x128xf32>
    %110 = arith.negf %109 : vector<8x128xf32>
    %111 = math.exp %110 : vector<8x128xf32>
    %cst_27 = arith.constant 1.000000e+00 : f32
    %112 = vector.broadcast %cst_27 : f32 to vector<8x128xf32>
    %113 = arith.addf %112, %111 : vector<8x128xf32>
    %114 = arith.divf %112, %113 : vector<8x128xf32>
    %115 = math.tanh %109 : vector<8x128xf32>
    %116 = vector.extract_strided_slice %114 {offsets = [0, 0], sizes = [8, 32], strides = [1, 1]} : vector<8x128xf32> to vector<8x32xf32>
    %117 = vector.extract_strided_slice %114 {offsets = [0, 32], sizes = [8, 32], strides = [1, 1]} : vector<8x128xf32> to vector<8x32xf32>
    %118 = vector.extract_strided_slice %115 {offsets = [0, 64], sizes = [8, 32], strides = [1, 1]} : vector<8x128xf32> to vector<8x32xf32>
    %119 = vector.extract_strided_slice %114 {offsets = [0, 96], sizes = [8, 32], strides = [1, 1]} : vector<8x128xf32> to vector<8x32xf32>
    %120 = arith.mulf %117, %104 : vector<8x32xf32>
    %121 = arith.mulf %116, %118 : vector<8x32xf32>
    %122 = arith.addf %120, %121 : vector<8x32xf32>
    %123 = math.tanh %122 : vector<8x32xf32>
    %124 = arith.mulf %119, %123 : vector<8x32xf32>
    %125 = vector.extract_strided_slice %8 {offsets = [48, 0], sizes = [8, 128], strides = [1, 1]} : vector<64x128xf32> to vector<8x128xf32>
    %cst_28 = arith.constant dense<0.000000e+00> : vector<8x128xf32>
    %126 = tpu.matmul %124, %1, %cst_28 {dimension_numbers = #tpu.dot_dimension_numbers<[1], [0], [0], [1], [0, 0, 1, 1], [], []>} : vector<8x32xf32>, vector<32x128xf32>, vector<8x128xf32> -> vector<8x128xf32>
    %127 = arith.addf %125, %126 : vector<8x128xf32>
    %128 = arith.negf %127 : vector<8x128xf32>
    %129 = math.exp %128 : vector<8x128xf32>
    %cst_29 = arith.constant 1.000000e+00 : f32
    %130 = vector.broadcast %cst_29 : f32 to vector<8x128xf32>
    %131 = arith.addf %130, %129 : vector<8x128xf32>
    %132 = arith.divf %130, %131 : vector<8x128xf32>
    %133 = math.tanh %127 : vector<8x128xf32>
    %134 = vector.extract_strided_slice %132 {offsets = [0, 0], sizes = [8, 32], strides = [1, 1]} : vector<8x128xf32> to vector<8x32xf32>
    %135 = vector.extract_strided_slice %132 {offsets = [0, 32], sizes = [8, 32], strides = [1, 1]} : vector<8x128xf32> to vector<8x32xf32>
    %136 = vector.extract_strided_slice %133 {offsets = [0, 64], sizes = [8, 32], strides = [1, 1]} : vector<8x128xf32> to vector<8x32xf32>
    %137 = vector.extract_strided_slice %132 {offsets = [0, 96], sizes = [8, 32], strides = [1, 1]} : vector<8x128xf32> to vector<8x32xf32>
    %138 = arith.mulf %135, %122 : vector<8x32xf32>
    %139 = arith.mulf %134, %136 : vector<8x32xf32>
    %140 = arith.addf %138, %139 : vector<8x32xf32>
    %141 = math.tanh %140 : vector<8x32xf32>
    %142 = arith.mulf %137, %141 : vector<8x32xf32>
    %143 = vector.extract_strided_slice %8 {offsets = [56, 0], sizes = [8, 128], strides = [1, 1]} : vector<64x128xf32> to vector<8x128xf32>
    %cst_30 = arith.constant dense<0.000000e+00> : vector<8x128xf32>
    %144 = tpu.matmul %142, %1, %cst_30 {dimension_numbers = #tpu.dot_dimension_numbers<[1], [0], [0], [1], [0, 0, 1, 1], [], []>} : vector<8x32xf32>, vector<32x128xf32>, vector<8x128xf32> -> vector<8x128xf32>
    %145 = arith.addf %143, %144 : vector<8x128xf32>
    %146 = arith.negf %145 : vector<8x128xf32>
    %147 = math.exp %146 : vector<8x128xf32>
    %cst_31 = arith.constant 1.000000e+00 : f32
    %148 = vector.broadcast %cst_31 : f32 to vector<8x128xf32>
    %149 = arith.addf %148, %147 : vector<8x128xf32>
    %150 = arith.divf %148, %149 : vector<8x128xf32>
    %151 = math.tanh %145 : vector<8x128xf32>
    %152 = vector.extract_strided_slice %150 {offsets = [0, 0], sizes = [8, 32], strides = [1, 1]} : vector<8x128xf32> to vector<8x32xf32>
    %153 = vector.extract_strided_slice %150 {offsets = [0, 32], sizes = [8, 32], strides = [1, 1]} : vector<8x128xf32> to vector<8x32xf32>
    %154 = vector.extract_strided_slice %151 {offsets = [0, 64], sizes = [8, 32], strides = [1, 1]} : vector<8x128xf32> to vector<8x32xf32>
    %155 = vector.extract_strided_slice %150 {offsets = [0, 96], sizes = [8, 32], strides = [1, 1]} : vector<8x128xf32> to vector<8x32xf32>
    %156 = arith.mulf %153, %140 : vector<8x32xf32>
    %157 = arith.mulf %152, %154 : vector<8x32xf32>
    %158 = arith.addf %156, %157 : vector<8x32xf32>
    %159 = math.tanh %158 : vector<8x32xf32>
    %160 = arith.mulf %155, %159 : vector<8x32xf32>
    %cst_32 = arith.constant dense<0.000000e+00> : vector<8x1xf32>
    %161 = tpu.matmul %160, %3, %cst_32 {dimension_numbers = #tpu.dot_dimension_numbers<[1], [0], [0], [1], [0, 0, 1, 1], [], []>} : vector<8x32xf32>, vector<32x1xf32>, vector<8x1xf32> -> vector<8x1xf32>
    %162 = vector.broadcast %4 : vector<1x1xf32> to vector<8x1xf32>
    %163 = arith.addf %161, %162 : vector<8x1xf32>
    %164 = vector.broadcast %163 : vector<8x1xf32> to vector<8x128xf32>
    %165 = vector.broadcast %9 : vector<1x128xf32> to vector<8x128xf32>
    %166 = arith.mulf %164, %165 : vector<8x128xf32>
    %167 = vector.extract_strided_slice %14 {offsets = [0, 0], sizes = [8, 128], strides = [1, 1]} : vector<32x128xf32> to vector<8x128xf32>
    %168 = arith.addf %167, %166 : vector<8x128xf32>
    %cst_33 = arith.constant dense<0.000000e+00> : vector<8x128xf32>
    %169 = tpu.matmul %160, %1, %cst_33 {dimension_numbers = #tpu.dot_dimension_numbers<[1], [0], [0], [1], [0, 0, 1, 1], [], []>} : vector<8x32xf32>, vector<32x128xf32>, vector<8x128xf32> -> vector<8x128xf32>
    %170 = arith.addf %168, %169 : vector<8x128xf32>
    %171 = arith.negf %170 : vector<8x128xf32>
    %172 = math.exp %171 : vector<8x128xf32>
    %cst_34 = arith.constant 1.000000e+00 : f32
    %173 = vector.broadcast %cst_34 : f32 to vector<8x128xf32>
    %174 = arith.addf %173, %172 : vector<8x128xf32>
    %175 = arith.divf %173, %174 : vector<8x128xf32>
    %176 = math.tanh %170 : vector<8x128xf32>
    %177 = vector.extract_strided_slice %175 {offsets = [0, 0], sizes = [8, 32], strides = [1, 1]} : vector<8x128xf32> to vector<8x32xf32>
    %178 = vector.extract_strided_slice %175 {offsets = [0, 32], sizes = [8, 32], strides = [1, 1]} : vector<8x128xf32> to vector<8x32xf32>
    %179 = vector.extract_strided_slice %176 {offsets = [0, 64], sizes = [8, 32], strides = [1, 1]} : vector<8x128xf32> to vector<8x32xf32>
    %180 = vector.extract_strided_slice %175 {offsets = [0, 96], sizes = [8, 32], strides = [1, 1]} : vector<8x128xf32> to vector<8x32xf32>
    %181 = arith.mulf %178, %158 : vector<8x32xf32>
    %182 = arith.mulf %177, %179 : vector<8x32xf32>
    %183 = arith.addf %181, %182 : vector<8x32xf32>
    %184 = math.tanh %183 : vector<8x32xf32>
    %185 = arith.mulf %180, %184 : vector<8x32xf32>
    %cst_35 = arith.constant dense<0.000000e+00> : vector<8x1xf32>
    %186 = tpu.matmul %185, %3, %cst_35 {dimension_numbers = #tpu.dot_dimension_numbers<[1], [0], [0], [1], [0, 0, 1, 1], [], []>} : vector<8x32xf32>, vector<32x1xf32>, vector<8x1xf32> -> vector<8x1xf32>
    %187 = vector.broadcast %4 : vector<1x1xf32> to vector<8x1xf32>
    %188 = arith.addf %186, %187 : vector<8x1xf32>
    %c0_36 = arith.constant 0 : index
    %c0_37 = arith.constant 0 : index
    %189 = vector.load %arg7[%c0_36, %c0_37] : memref<32x1xf32, #tpu.memory_space<vmem>>, vector<8x1xf32>
    tpu.vector_store %arg7[%c0_36, %c0_37], %188 {strides = array<i32>} : memref<32x1xf32, #tpu.memory_space<vmem>>, vector<8x1xf32>,
    %190 = vector.broadcast %188 : vector<8x1xf32> to vector<8x128xf32>
    %191 = vector.broadcast %9 : vector<1x128xf32> to vector<8x128xf32>
    %192 = arith.mulf %190, %191 : vector<8x128xf32>
    %193 = vector.extract_strided_slice %14 {offsets = [8, 0], sizes = [8, 128], strides = [1, 1]} : vector<32x128xf32> to vector<8x128xf32>
    %194 = arith.addf %193, %192 : vector<8x128xf32>
    %cst_38 = arith.constant dense<0.000000e+00> : vector<8x128xf32>
    %195 = tpu.matmul %185, %1, %cst_38 {dimension_numbers = #tpu.dot_dimension_numbers<[1], [0], [0], [1], [0, 0, 1, 1], [], []>} : vector<8x32xf32>, vector<32x128xf32>, vector<8x128xf32> -> vector<8x128xf32>
    %196 = arith.addf %194, %195 : vector<8x128xf32>
    %197 = arith.negf %196 : vector<8x128xf32>
    %198 = math.exp %197 : vector<8x128xf32>
    %cst_39 = arith.constant 1.000000e+00 : f32
    %199 = vector.broadcast %cst_39 : f32 to vector<8x128xf32>
    %200 = arith.addf %199, %198 : vector<8x128xf32>
    %201 = arith.divf %199, %200 : vector<8x128xf32>
    %202 = math.tanh %196 : vector<8x128xf32>
    %203 = vector.extract_strided_slice %201 {offsets = [0, 0], sizes = [8, 32], strides = [1, 1]} : vector<8x128xf32> to vector<8x32xf32>
    %204 = vector.extract_strided_slice %201 {offsets = [0, 32], sizes = [8, 32], strides = [1, 1]} : vector<8x128xf32> to vector<8x32xf32>
    %205 = vector.extract_strided_slice %202 {offsets = [0, 64], sizes = [8, 32], strides = [1, 1]} : vector<8x128xf32> to vector<8x32xf32>
    %206 = vector.extract_strided_slice %201 {offsets = [0, 96], sizes = [8, 32], strides = [1, 1]} : vector<8x128xf32> to vector<8x32xf32>
    %207 = arith.mulf %204, %183 : vector<8x32xf32>
    %208 = arith.mulf %203, %205 : vector<8x32xf32>
    %209 = arith.addf %207, %208 : vector<8x32xf32>
    %210 = math.tanh %209 : vector<8x32xf32>
    %211 = arith.mulf %206, %210 : vector<8x32xf32>
    %cst_40 = arith.constant dense<0.000000e+00> : vector<8x1xf32>
    %212 = tpu.matmul %211, %3, %cst_40 {dimension_numbers = #tpu.dot_dimension_numbers<[1], [0], [0], [1], [0, 0, 1, 1], [], []>} : vector<8x32xf32>, vector<32x1xf32>, vector<8x1xf32> -> vector<8x1xf32>
    %213 = vector.broadcast %4 : vector<1x1xf32> to vector<8x1xf32>
    %214 = arith.addf %212, %213 : vector<8x1xf32>
    %c8 = arith.constant 8 : index
    %c0_41 = arith.constant 0 : index
    %215 = vector.load %arg7[%c8, %c0_41] : memref<32x1xf32, #tpu.memory_space<vmem>>, vector<8x1xf32>
    tpu.vector_store %arg7[%c8, %c0_41], %214 {strides = array<i32>} : memref<32x1xf32, #tpu.memory_space<vmem>>, vector<8x1xf32>,
    %216 = vector.broadcast %214 : vector<8x1xf32> to vector<8x128xf32>
    %217 = vector.broadcast %9 : vector<1x128xf32> to vector<8x128xf32>
    %218 = arith.mulf %216, %217 : vector<8x128xf32>
    %219 = vector.extract_strided_slice %14 {offsets = [16, 0], sizes = [8, 128], strides = [1, 1]} : vector<32x128xf32> to vector<8x128xf32>
    %220 = arith.addf %219, %218 : vector<8x128xf32>
    %cst_42 = arith.constant dense<0.000000e+00> : vector<8x128xf32>
    %221 = tpu.matmul %211, %1, %cst_42 {dimension_numbers = #tpu.dot_dimension_numbers<[1], [0], [0], [1], [0, 0, 1, 1], [], []>} : vector<8x32xf32>, vector<32x128xf32>, vector<8x128xf32> -> vector<8x128xf32>
    %222 = arith.addf %220, %221 : vector<8x128xf32>
    %223 = arith.negf %222 : vector<8x128xf32>
    %224 = math.exp %223 : vector<8x128xf32>
    %cst_43 = arith.constant 1.000000e+00 : f32
    %225 = vector.broadcast %cst_43 : f32 to vector<8x128xf32>
    %226 = arith.addf %225, %224 : vector<8x128xf32>
    %227 = arith.divf %225, %226 : vector<8x128xf32>
    %228 = math.tanh %222 : vector<8x128xf32>
    %229 = vector.extract_strided_slice %227 {offsets = [0, 0], sizes = [8, 32], strides = [1, 1]} : vector<8x128xf32> to vector<8x32xf32>
    %230 = vector.extract_strided_slice %227 {offsets = [0, 32], sizes = [8, 32], strides = [1, 1]} : vector<8x128xf32> to vector<8x32xf32>
    %231 = vector.extract_strided_slice %228 {offsets = [0, 64], sizes = [8, 32], strides = [1, 1]} : vector<8x128xf32> to vector<8x32xf32>
    %232 = vector.extract_strided_slice %227 {offsets = [0, 96], sizes = [8, 32], strides = [1, 1]} : vector<8x128xf32> to vector<8x32xf32>
    %233 = arith.mulf %230, %209 : vector<8x32xf32>
    %234 = arith.mulf %229, %231 : vector<8x32xf32>
    %235 = arith.addf %233, %234 : vector<8x32xf32>
    %236 = math.tanh %235 : vector<8x32xf32>
    %237 = arith.mulf %232, %236 : vector<8x32xf32>
    %cst_44 = arith.constant dense<0.000000e+00> : vector<8x1xf32>
    %238 = tpu.matmul %237, %3, %cst_44 {dimension_numbers = #tpu.dot_dimension_numbers<[1], [0], [0], [1], [0, 0, 1, 1], [], []>} : vector<8x32xf32>, vector<32x1xf32>, vector<8x1xf32> -> vector<8x1xf32>
    %239 = vector.broadcast %4 : vector<1x1xf32> to vector<8x1xf32>
    %240 = arith.addf %238, %239 : vector<8x1xf32>
    %c16 = arith.constant 16 : index
    %c0_45 = arith.constant 0 : index
    %241 = vector.load %arg7[%c16, %c0_45] : memref<32x1xf32, #tpu.memory_space<vmem>>, vector<8x1xf32>
    tpu.vector_store %arg7[%c16, %c0_45], %240 {strides = array<i32>} : memref<32x1xf32, #tpu.memory_space<vmem>>, vector<8x1xf32>,
    %242 = vector.broadcast %240 : vector<8x1xf32> to vector<8x128xf32>
    %243 = vector.broadcast %9 : vector<1x128xf32> to vector<8x128xf32>
    %244 = arith.mulf %242, %243 : vector<8x128xf32>
    %245 = vector.extract_strided_slice %14 {offsets = [24, 0], sizes = [8, 128], strides = [1, 1]} : vector<32x128xf32> to vector<8x128xf32>
    %246 = arith.addf %245, %244 : vector<8x128xf32>
    %cst_46 = arith.constant dense<0.000000e+00> : vector<8x128xf32>
    %247 = tpu.matmul %237, %1, %cst_46 {dimension_numbers = #tpu.dot_dimension_numbers<[1], [0], [0], [1], [0, 0, 1, 1], [], []>} : vector<8x32xf32>, vector<32x128xf32>, vector<8x128xf32> -> vector<8x128xf32>
    %248 = arith.addf %246, %247 : vector<8x128xf32>
    %249 = arith.negf %248 : vector<8x128xf32>
    %250 = math.exp %249 : vector<8x128xf32>
    %cst_47 = arith.constant 1.000000e+00 : f32
    %251 = vector.broadcast %cst_47 : f32 to vector<8x128xf32>
    %252 = arith.addf %251, %250 : vector<8x128xf32>
    %253 = arith.divf %251, %252 : vector<8x128xf32>
    %254 = math.tanh %248 : vector<8x128xf32>
    %255 = vector.extract_strided_slice %253 {offsets = [0, 0], sizes = [8, 32], strides = [1, 1]} : vector<8x128xf32> to vector<8x32xf32>
    %256 = vector.extract_strided_slice %253 {offsets = [0, 32], sizes = [8, 32], strides = [1, 1]} : vector<8x128xf32> to vector<8x32xf32>
    %257 = vector.extract_strided_slice %254 {offsets = [0, 64], sizes = [8, 32], strides = [1, 1]} : vector<8x128xf32> to vector<8x32xf32>
    %258 = vector.extract_strided_slice %253 {offsets = [0, 96], sizes = [8, 32], strides = [1, 1]} : vector<8x128xf32> to vector<8x32xf32>
    %259 = arith.mulf %256, %235 : vector<8x32xf32>
    %260 = arith.mulf %255, %257 : vector<8x32xf32>
    %261 = arith.addf %259, %260 : vector<8x32xf32>
    %262 = math.tanh %261 : vector<8x32xf32>
    %263 = arith.mulf %258, %262 : vector<8x32xf32>
    %cst_48 = arith.constant dense<0.000000e+00> : vector<8x1xf32>
    %264 = tpu.matmul %263, %3, %cst_48 {dimension_numbers = #tpu.dot_dimension_numbers<[1], [0], [0], [1], [0, 0, 1, 1], [], []>} : vector<8x32xf32>, vector<32x1xf32>, vector<8x1xf32> -> vector<8x1xf32>
    %265 = vector.broadcast %4 : vector<1x1xf32> to vector<8x1xf32>
    %266 = arith.addf %264, %265 : vector<8x1xf32>
    %c24 = arith.constant 24 : index
    %c0_49 = arith.constant 0 : index
    %267 = vector.load %arg7[%c24, %c0_49] : memref<32x1xf32, #tpu.memory_space<vmem>>, vector<8x1xf32>
    tpu.vector_store %arg7[%c24, %c0_49], %266 {strides = array<i32>} : memref<32x1xf32, #tpu.memory_space<vmem>>, vector<8x1xf32>,
    return
  }
}

</mosaic_0001>

<llo_original>
// kernel: simple_occ_lstm_forward.1
$region0: #{simple_occ_lstm_forward.1}
  #allocation0 [shape = 'u32[]', space=smem, size = 0x4, offset = 0x4, fixed_abs, tag = 'smem constant byte address 0x4 - core index']
  #allocation1 [shape = 'u32[144,128]{1,0:T(1,128)}', space=vmem, size = 0x12000, scoped, tag = 'internal scratch']
  #allocation2 [shape = 'f32[1,1]{1,0:T(1,128)S(1)}', space=vmem, size = 0x200, scoped, tag = 'scoped memory for simple_occ_lstm_forward.1']
  %s0 = inlined_call_operand.vmem [shape: f32[64,4], index: 0, kind: input, shape index: {}]
  %s1 = inlined_call_operand.vmem [shape: f32[32,3], index: 1, kind: input, shape index: {}]
  %s2 = inlined_call_operand.vmem [shape: f32[4,128], index: 2, kind: input, shape index: {}]
  %s3 = inlined_call_operand.vmem [shape: f32[32,128], index: 3, kind: input, shape index: {}]
  %s4 = inlined_call_operand.vmem [shape: f32[1,128], index: 4, kind: input, shape index: {}]
  %s5 = inlined_call_operand.vmem [shape: f32[32,1], index: 5, kind: input, shape index: {}]
  %s6 = inlined_call_operand.<no memory space> [shape: f32[1,1], index: 6, kind: input, shape index: {}]
  %s7 = inlined_call_operand.vmem [shape: f32[32,1], index: 7, kind: output, shape index: {}]
  %s8 = sld [smem:[#allocation0]]
  $region38: #{simple_occ_lstm_forward.1} parent=0
    _
  %s10 = ssub.s32 1, %s8
  %s11 = scalar_select 0, %s10, %s8
  %v12 = vstv %s6
  %13 = vst [vmem:[#allocation2] sm:$0x1] %v12
  // Predicated region
  $region2: #{simple_occ_lstm_forward.1} parent=0 // pred_check
    _
  $region3: #{simple_occ_lstm_forward.1} parent=0 // pred_check_branch
    %15 = sbr.rel (0) target = $region5
  $region4: #{simple_occ_lstm_forward.1} parent=0 // pred_region
    _
  $region5: #{simple_occ_lstm_forward.1} parent=0 // pred_fallthru
    _
  // Predicated region
  $region6: #{simple_occ_lstm_forward.1} parent=0 // pred_check
    _
  $region7: #{simple_occ_lstm_forward.1} parent=0 // pred_check_branch
    %17 = sbr.rel (0) target = $region9
  $region8: #{simple_occ_lstm_forward.1} parent=0 // pred_region
    _
  $region9: #{simple_occ_lstm_forward.1} parent=0 // pred_fallthru
    _
  // Predicated region
  $region10: #{simple_occ_lstm_forward.1} parent=0 // pred_check
    _
  $region11: #{simple_occ_lstm_forward.1} parent=0 // pred_check_branch
    %19 = sbr.rel (0) target = $region13
  $region12: #{simple_occ_lstm_forward.1} parent=0 // pred_region
    _
  $region13: #{simple_occ_lstm_forward.1} parent=0 // pred_fallthru
    _
  // Predicated region
  $region14: #{simple_occ_lstm_forward.1} parent=0 // pred_check
    _
  $region15: #{simple_occ_lstm_forward.1} parent=0 // pred_check_branch
    %21 = sbr.rel (0) target = $region17
  $region16: #{simple_occ_lstm_forward.1} parent=0 // pred_region
    _
  $region17: #{simple_occ_lstm_forward.1} parent=0 // pred_fallthru
    _
  // Predicated region
  $region18: #{simple_occ_lstm_forward.1} parent=0 // pred_check
    _
  $region19: #{simple_occ_lstm_forward.1} parent=0 // pred_check_branch
    %23 = sbr.rel (0) target = $region21
  $region20: #{simple_occ_lstm_forward.1} parent=0 // pred_region
    _
  $region21: #{simple_occ_lstm_forward.1} parent=0 // pred_fallthru
    _
  // Predicated region
  $region22: #{simple_occ_lstm_forward.1} parent=0 // pred_check
    _
  $region23: #{simple_occ_lstm_forward.1} parent=0 // pred_check_branch
    %25 = sbr.rel (0) target = $region25
  $region24: #{simple_occ_lstm_forward.1} parent=0 // pred_region
    _
  $region25: #{simple_occ_lstm_forward.1} parent=0 // pred_fallthru
    _
  // Predicated region
  $region26: #{simple_occ_lstm_forward.1} parent=0 // pred_check
    _
  $region27: #{simple_occ_lstm_forward.1} parent=0 // pred_check_branch
    %27 = sbr.rel (0) target = $region29
  $region28: #{simple_occ_lstm_forward.1} parent=0 // pred_region
    _
  $region29: #{simple_occ_lstm_forward.1} parent=0 // pred_fallthru
    _
  %v28 = vld [vmem:[%s2] sm:$0xf]
  %v29 = vld [vmem:[%s3] sm:$0xff]
  %v30 = vld [vmem:[%s3 + $0x8] sm:$0xff]
  %v31 = vld [vmem:[%s3 + $0x10] sm:$0xff]
  %v32 = vld [vmem:[%s3 + $0x18] sm:$0xff]
  %v33 = vld [vmem:[%s4] sm:$0x1]
  %v34 = vld [vmem:[%s5] sm:$0xff]
  %v35 = vld [vmem:[%s5 + $0x8] sm:$0xff]
  %v36 = vld [vmem:[%s5 + $0x10] sm:$0xff]
  %v37 = vld [vmem:[%s5 + $0x18] sm:$0xff]
  %v38 = vld [vmem:[#allocation2] sm:$0x1]
  %v39 = vld [vmem:[%s0] sm:$0xff]
  %v40 = vld [vmem:[%s0 + $0x8] sm:$0xff]
  %v41 = vld [vmem:[%s0 + $0x10] sm:$0xff]
  %v42 = vld [vmem:[%s0 + $0x18] sm:$0xff]
  %v43 = vld [vmem:[%s0 + $0x20] sm:$0xff]
  %v44 = vld [vmem:[%s0 + $0x28] sm:$0xff]
  %v45 = vld [vmem:[%s0 + $0x30] sm:$0xff]
  %v46 = vld [vmem:[%s0 + $0x38] sm:$0xff]
  %v48 = vlaneseq
  %v49 = vshrl.u32 %v48, 7
  %v50 = vsub.s32 0, %v49
  %v51 = vrot.slane %v33, %v50
  %vm53 = vcmask 31744
  %v55 = vsel %vm53, %v39, 0
  %v58 = vsel %vm53, %v40, 0
  %v61 = vsel %vm53, %v41, 0
  %v64 = vsel %vm53, %v42, 0
  %v67 = vsel %vm53, %v43, 0
  %v70 = vsel %vm53, %v44, 0
  %v73 = vsel %vm53, %v45, 0
  %v76 = vsel %vm53, %v46, 0
  %vm78 = vcmask 1043456
  %v80 = vsel %vm78, %v28, 0
  %82 = vmatprep.subr.mxu0 0.0
  %83 = vmatpush1.msra.mxu0 0.0
  %84 = vmatprep.subr.mxu0 0.0
  %85 = vmatpush1.msra.mxu0 0.0
  %86 = vmatprep.subr.mxu0 0.0
  %87 = vmatpush1.msra.mxu0 0.0
  %88 = vmatprep.subr.mxu0 0.0
  %89 = vmatpush1.msra.mxu0 0.0
  %90 = vmatprep.subr.mxu0 0.0
  %91 = vmatpush1.msra.mxu0 0.0
  %92 = vmatprep.subr.mxu0 0.0
  %93 = vmatpush1.msra.mxu0 0.0
  %94 = vmatprep.subr.mxu0 0.0
  %95 = vmatpush1.msra.mxu0 0.0
  %96 = vmatprep.subr.mxu0 0.0
  %97 = vmatpush1.msra.mxu0 0.0
  %98 = vmatprep.subr.mxu0 0.0
  %99 = vmatpush1.msra.mxu0 0.0
  %100 = vmatprep.subr.mxu0 0.0
  %101 = vmatpush1.msra.mxu0 0.0
  %102 = vmatprep.subr.mxu0 0.0
  %103 = vmatpush1.msra.mxu0 0.0
  %104 = vmatprep.subr.mxu0 0.0
  %105 = vmatpush1.msra.mxu0 0.0
  %106 = vmatprep.subr.mxu0 0.0
  %107 = vmatpush1.msra.mxu0 0.0
  %108 = vmatprep.subr.mxu0 0.0
  %109 = vmatpush1.msra.mxu0 0.0
  %110 = vmatprep.subr.mxu0 0.0
  %111 = vmatpush1.msra.mxu0 0.0
  %112 = vmatprep.subr.mxu0 0.0
  %113 = vmatpush1.msra.mxu0 %v80
  %114 = vmatprep.subr.mxu0 0.0
  %115 = vmatpush2.msra.mxu0 0.0
  %116 = vmatprep.subr.mxu0 0.0
  %117 = vmatpush2.msra.mxu0 0.0
  %118 = vmatprep.subr.mxu0 0.0
  %119 = vmatpush2.msra.mxu0 0.0
  %120 = vmatprep.subr.mxu0 0.0
  %121 = vmatpush2.msra.mxu0 0.0
  %122 = vmatprep.subr.mxu0 0.0
  %123 = vmatpush2.msra.mxu0 0.0
  %124 = vmatprep.subr.mxu0 0.0
  %125 = vmatpush2.msra.mxu0 0.0
  %126 = vmatprep.subr.mxu0 0.0
  %127 = vmatpush2.msra.mxu0 0.0
  %128 = vmatprep.subr.mxu0 0.0
  %129 = vmatpush2.msra.mxu0 0.0
  %130 = vmatprep.subr.mxu0 0.0
  %131 = vmatpush2.msra.mxu0 0.0
  %132 = vmatprep.subr.mxu0 0.0
  %133 = vmatpush2.msra.mxu0 0.0
  %134 = vmatprep.subr.mxu0 0.0
  %135 = vmatpush2.msra.mxu0 0.0
  %136 = vmatprep.subr.mxu0 0.0
  %137 = vmatpush2.msra.mxu0 0.0
  %138 = vmatprep.subr.mxu0 0.0
  %139 = vmatpush2.msra.mxu0 0.0
  %140 = vmatprep.subr.mxu0 0.0
  %141 = vmatpush2.msra.mxu0 0.0
  %142 = vmatprep.subr.mxu0 0.0
  %143 = vmatpush2.msra.mxu0 0.0
  %144 = vmatprep.subr.mxu0 0.0
  %145 = vmatpush2.msra.mxu0 0.0
  %146 = vmatprep.mubr.f32.mxu0 0.0
  %147 = vmatmul.mubr.f32.gmra.mxu0 %v55
  %v148 = vpop.f32.mrf.mxu0
  %v149 = vadd.f32 %v51, %v148
  %v150 = vpop.f32.mrf.mxu0
  %151 = vmatprep.mubr.f32.mxu0 0.0
  %152 = vmatmul.mubr.f32.gmra.mxu0 %v58
  %v153 = vpop.f32.mrf.mxu0
  %v154 = vadd.f32 %v51, %v153
  %v155 = vpop.f32.mrf.mxu0
  %156 = vmatprep.mubr.f32.mxu0 0.0
  %157 = vmatmul.mubr.f32.gmra.mxu0 %v61
  %v158 = vpop.f32.mrf.mxu0
  %v159 = vadd.f32 %v51, %v158
  %v160 = vpop.f32.mrf.mxu0
  %161 = vmatprep.mubr.f32.mxu0 0.0
  %162 = vmatmul.mubr.f32.gmra.mxu0 %v64
  %v163 = vpop.f32.mrf.mxu0
  %v164 = vadd.f32 %v51, %v163
  %v165 = vpop.f32.mrf.mxu0
  %166 = vmatprep.mubr.f32.mxu0 0.0
  %167 = vmatmul.mubr.f32.gmra.mxu0 %v67
  %v168 = vpop.f32.mrf.mxu0
  %v169 = vadd.f32 %v51, %v168
  %v170 = vpop.f32.mrf.mxu0
  %171 = vmatprep.mubr.f32.mxu0 0.0
  %172 = vmatmul.mubr.f32.gmra.mxu0 %v70
  %v173 = vpop.f32.mrf.mxu0
  %v174 = vadd.f32 %v51, %v173
  %v175 = vpop.f32.mrf.mxu0
  %176 = vmatprep.mubr.f32.mxu0 0.0
  %177 = vmatmul.mubr.f32.gmra.mxu0 %v73
  %v178 = vpop.f32.mrf.mxu0
  %v179 = vadd.f32 %v51, %v178
  %v180 = vpop.f32.mrf.mxu0
  %181 = vmatprep.mubr.f32.mxu0 0.0
  %182 = vmatmul.mubr.f32.gmra.mxu0 %v76
  %v183 = vpop.f32.mrf.mxu0
  %v184 = vadd.f32 %v51, %v183
  %v185 = vpop.f32.mrf.mxu0
  %186 = vdwg.mxu0
  %v187 = vld [vmem:[%s1] sm:$0xff]
  %v188 = vld [vmem:[%s1 + $0x8] sm:$0xff]
  %v189 = vld [vmem:[%s1 + $0x10] sm:$0xff]
  %v190 = vld [vmem:[%s1 + $0x18] sm:$0xff]
  %v191 = vrot.slane %v28, 1
  %vm192 = vcmask 23552
  %v194 = vsel %vm192, %v187, 0
  %v197 = vsel %vm192, %v188, 0
  %v200 = vsel %vm192, %v189, 0
  %v203 = vsel %vm192, %v190, 0
  %vm205 = vcmask 1042432
  %v206 = vsel %vm205, %v191, 0
  %208 = vmatprep.subr.mxu0 0.0
  %209 = vmatpush1.msra.mxu0 0.0
  %210 = vmatprep.subr.mxu0 0.0
  %211 = vmatpush1.msra.mxu0 0.0
  %212 = vmatprep.subr.mxu0 0.0
  %213 = vmatpush1.msra.mxu0 0.0
  %214 = vmatprep.subr.mxu0 0.0
  %215 = vmatpush1.msra.mxu0 0.0
  %216 = vmatprep.subr.mxu0 0.0
  %217 = vmatpush1.msra.mxu0 0.0
  %218 = vmatprep.subr.mxu0 0.0
  %219 = vmatpush1.msra.mxu0 0.0
  %220 = vmatprep.subr.mxu0 0.0
  %221 = vmatpush1.msra.mxu0 0.0
  %222 = vmatprep.subr.mxu0 0.0
  %223 = vmatpush1.msra.mxu0 0.0
  %224 = vmatprep.subr.mxu0 0.0
  %225 = vmatpush1.msra.mxu0 0.0
  %226 = vmatprep.subr.mxu0 0.0
  %227 = vmatpush1.msra.mxu0 0.0
  %228 = vmatprep.subr.mxu0 0.0
  %229 = vmatpush1.msra.mxu0 0.0
  %230 = vmatprep.subr.mxu0 0.0
  %231 = vmatpush1.msra.mxu0 0.0
  %232 = vmatprep.subr.mxu0 0.0
  %233 = vmatpush1.msra.mxu0 0.0
  %234 = vmatprep.subr.mxu0 0.0
  %235 = vmatpush1.msra.mxu0 0.0
  %236 = vmatprep.subr.mxu0 0.0
  %237 = vmatpush1.msra.mxu0 0.0
  %238 = vmatprep.subr.mxu0 0.0
  %239 = vmatpush1.msra.mxu0 %v206
  %240 = vmatprep.subr.mxu0 0.0
  %241 = vmatpush2.msra.mxu0 0.0
  %242 = vmatprep.subr.mxu0 0.0
  %243 = vmatpush2.msra.mxu0 0.0
  %244 = vmatprep.subr.mxu0 0.0
  %245 = vmatpush2.msra.mxu0 0.0
  %246 = vmatprep.subr.mxu0 0.0
  %247 = vmatpush2.msra.mxu0 0.0
  %248 = vmatprep.subr.mxu0 0.0
  %249 = vmatpush2.msra.mxu0 0.0
  %250 = vmatprep.subr.mxu0 0.0
  %251 = vmatpush2.msra.mxu0 0.0
  %252 = vmatprep.subr.mxu0 0.0
  %253 = vmatpush2.msra.mxu0 0.0
  %254 = vmatprep.subr.mxu0 0.0
  %255 = vmatpush2.msra.mxu0 0.0
  %256 = vmatprep.subr.mxu0 0.0
  %257 = vmatpush2.msra.mxu0 0.0
  %258 = vmatprep.subr.mxu0 0.0
  %259 = vmatpush2.msra.mxu0 0.0
  %260 = vmatprep.subr.mxu0 0.0
  %261 = vmatpush2.msra.mxu0 0.0
  %262 = vmatprep.subr.mxu0 0.0
  %263 = vmatpush2.msra.mxu0 0.0
  %264 = vmatprep.subr.mxu0 0.0
  %265 = vmatpush2.msra.mxu0 0.0
  %266 = vmatprep.subr.mxu0 0.0
  %267 = vmatpush2.msra.mxu0 0.0
  %268 = vmatprep.subr.mxu0 0.0
  %269 = vmatpush2.msra.mxu0 0.0
  %270 = vmatprep.subr.mxu0 0.0
  %271 = vmatpush2.msra.mxu0 0.0
  %272 = vmatprep.mubr.f32.mxu0 0.0
  %273 = vmatmul.mubr.f32.gmra.mxu0 %v194
  %v274 = vpop.f32.mrf.mxu0
  %v275 = vadd.f32 %v51, %v274
  %v276 = vpop.f32.mrf.mxu0
  %277 = vmatprep.mubr.f32.mxu0 0.0
  %278 = vmatmul.mubr.f32.gmra.mxu0 %v197
  %v279 = vpop.f32.mrf.mxu0
  %v280 = vadd.f32 %v51, %v279
  %v281 = vpop.f32.mrf.mxu0
  %282 = vmatprep.mubr.f32.mxu0 0.0
  %283 = vmatmul.mubr.f32.gmra.mxu0 %v200
  %v284 = vpop.f32.mrf.mxu0
  %v285 = vadd.f32 %v51, %v284
  %v286 = vpop.f32.mrf.mxu0
  %287 = vmatprep.mubr.f32.mxu0 0.0
  %288 = vmatmul.mubr.f32.gmra.mxu0 %v203
  %v289 = vpop.f32.mrf.mxu0
  %v290 = vadd.f32 %v51, %v289
  %v291 = vpop.f32.mrf.mxu0
  %292 = vdwg.mxu0
  %vm293 = vcmask 261120
  %v295 = vsel %vm293, 0.0, 0
  %297 = vmatprep.subr.mxu0 0.0
  %298 = vmatpush1.msra.mxu0 0.0
  %299 = vmatprep.subr.mxu0 0.0
  %300 = vmatpush1.msra.mxu0 0.0
  %301 = vmatprep.subr.mxu0 0.0
  %302 = vmatpush1.msra.mxu0 0.0
  %303 = vmatprep.subr.mxu0 0.0
  %304 = vmatpush1.msra.mxu0 0.0
  %305 = vmatprep.subr.mxu0 0.0
  %306 = vmatpush1.msra.mxu0 0.0
  %307 = vmatprep.subr.mxu0 0.0
  %308 = vmatpush1.msra.mxu0 0.0
  %309 = vmatprep.subr.mxu0 0.0
  %310 = vmatpush1.msra.mxu0 0.0
  %311 = vmatprep.subr.mxu0 0.0
  %312 = vmatpush1.msra.mxu0 0.0
  %313 = vmatprep.subr.mxu0 0.0
  %314 = vmatpush1.msra.mxu0 0.0
  %315 = vmatprep.subr.mxu0 0.0
  %316 = vmatpush1.msra.mxu0 0.0
  %317 = vmatprep.subr.mxu0 0.0
  %318 = vmatpush1.msra.mxu0 0.0
  %319 = vmatprep.subr.mxu0 0.0
  %320 = vmatpush1.msra.mxu0 0.0
  %321 = vmatprep.subr.mxu0 0.0
  %322 = vmatpush1.msra.mxu0 %v32
  %323 = vmatprep.subr.mxu0 0.0
  %324 = vmatpush1.msra.mxu0 %v31
  %325 = vmatprep.subr.mxu0 0.0
  %326 = vmatpush1.msra.mxu0 %v30
  %327 = vmatprep.subr.mxu0 0.0
  %328 = vmatpush1.msra.mxu0 %v29
  %329 = vmatprep.subr.mxu0 0.0
  %330 = vmatpush2.msra.mxu0 0.0
  %331 = vmatprep.subr.mxu0 0.0
  %332 = vmatpush2.msra.mxu0 0.0
  %333 = vmatprep.subr.mxu0 0.0
  %334 = vmatpush2.msra.mxu0 0.0
  %335 = vmatprep.subr.mxu0 0.0
  %336 = vmatpush2.msra.mxu0 0.0
  %337 = vmatprep.subr.mxu0 0.0
  %338 = vmatpush2.msra.mxu0 0.0
  %339 = vmatprep.subr.mxu0 0.0
  %340 = vmatpush2.msra.mxu0 0.0
  %341 = vmatprep.subr.mxu0 0.0
  %342 = vmatpush2.msra.mxu0 0.0
  %343 = vmatprep.subr.mxu0 0.0
  %344 = vmatpush2.msra.mxu0 0.0
  %345 = vmatprep.subr.mxu0 0.0
  %346 = vmatpush2.msra.mxu0 0.0
  %347 = vmatprep.subr.mxu0 0.0
  %348 = vmatpush2.msra.mxu0 0.0
  %349 = vmatprep.subr.mxu0 0.0
  %350 = vmatpush2.msra.mxu0 0.0
  %351 = vmatprep.subr.mxu0 0.0
  %352 = vmatpush2.msra.mxu0 0.0
  %353 = vmatprep.subr.mxu0 0.0
  %354 = vmatpush2.msra.mxu0 0.0
  %355 = vmatprep.subr.mxu0 0.0
  %356 = vmatpush2.msra.mxu0 0.0
  %357 = vmatprep.subr.mxu0 0.0
  %358 = vmatpush2.msra.mxu0 0.0
  %359 = vmatprep.subr.mxu0 0.0
  %360 = vmatpush2.msra.mxu0 0.0
  %361 = vmatprep.mubr.f32.mxu0 0.0
  %362 = vmatmul.mubr.f32.gmra.mxu0 %v295
  %v363 = vpop.f32.mrf.mxu0
  %v364 = vadd.f32 0.0, %v363
  %v365 = vpop.f32.mrf.mxu0
  %366 = vdwg.mxu0
  %v367 = vadd.f32 %v149, %v364
  %v368 = vxor.u32 %v367, 2147483648
  %v369 = vmul.f32 %v368, 1.442695
  %v370 = vpow.pop %v369
  %v371 = vadd.f32 %v370, 1.0
  %v372 = vrcp.pop %v371
  %v373 = vmul.f32 1.0, %v372
  %v374 = vtanh.pop %v367
  %v375 = vmul.f32 %v373, 0.0
  %377 = vrot.lane.b32.xlu0 %v374, 64
  %v378 = vpop.permute.xlu0 %377
  %v380 = vmul.f32 %v373, %v378
  %382 = vrot.lane.b32.xlu0 %v380, 32
  %v383 = vpop.permute.xlu0 %382
  %v385 = vadd.f32 %v375, %v383
  %v386 = vtanh.pop %v385
  %388 = vrot.lane.b32.xlu0 %v386, 64
  %v389 = vpop.permute.xlu0 %388
  %v391 = vmul.f32 %v373, %v389
  %393 = vrot.lane.b32.xlu0 %v391, 32
  %v394 = vpop.permute.xlu0 %393
  %v395 = vsel %vm293, %v394, 0
  %397 = vmatprep.subr.mxu0 0.0
  %398 = vmatpush1.msra.mxu0 0.0
  %399 = vmatprep.subr.mxu0 0.0
  %400 = vmatpush1.msra.mxu0 0.0
  %401 = vmatprep.subr.mxu0 0.0
  %402 = vmatpush1.msra.mxu0 0.0
  %403 = vmatprep.subr.mxu0 0.0
  %404 = vmatpush1.msra.mxu0 0.0
  %405 = vmatprep.subr.mxu0 0.0
  %406 = vmatpush1.msra.mxu0 0.0
  %407 = vmatprep.subr.mxu0 0.0
  %408 = vmatpush1.msra.mxu0 0.0
  %409 = vmatprep.subr.mxu0 0.0
  %410 = vmatpush1.msra.mxu0 0.0
  %411 = vmatprep.subr.mxu0 0.0
  %412 = vmatpush1.msra.mxu0 0.0
  %413 = vmatprep.subr.mxu0 0.0
  %414 = vmatpush1.msra.mxu0 0.0
  %415 = vmatprep.subr.mxu0 0.0
  %416 = vmatpush1.msra.mxu0 0.0
  %417 = vmatprep.subr.mxu0 0.0
  %418 = vmatpush1.msra.mxu0 0.0
  %419 = vmatprep.subr.mxu0 0.0
  %420 = vmatpush1.msra.mxu0 0.0
  %421 = vmatprep.subr.mxu0 0.0
  %422 = vmatpush1.msra.mxu0 %v32
  %423 = vmatprep.subr.mxu0 0.0
  %424 = vmatpush1.msra.mxu0 %v31
  %425 = vmatprep.subr.mxu0 0.0
  %426 = vmatpush1.msra.mxu0 %v30
  %427 = vmatprep.subr.mxu0 0.0
  %428 = vmatpush1.msra.mxu0 %v29
  %429 = vmatprep.subr.mxu0 0.0
  %430 = vmatpush2.msra.mxu0 0.0
  %431 = vmatprep.subr.mxu0 0.0
  %432 = vmatpush2.msra.mxu0 0.0
  %433 = vmatprep.subr.mxu0 0.0
  %434 = vmatpush2.msra.mxu0 0.0
  %435 = vmatprep.subr.mxu0 0.0
  %436 = vmatpush2.msra.mxu0 0.0
  %437 = vmatprep.subr.mxu0 0.0
  %438 = vmatpush2.msra.mxu0 0.0
  %439 = vmatprep.subr.mxu0 0.0
  %440 = vmatpush2.msra.mxu0 0.0
  %441 = vmatprep.subr.mxu0 0.0
  %442 = vmatpush2.msra.mxu0 0.0
  %443 = vmatprep.subr.mxu0 0.0
  %444 = vmatpush2.msra.mxu0 0.0
  %445 = vmatprep.subr.mxu0 0.0
  %446 = vmatpush2.msra.mxu0 0.0
  %447 = vmatprep.subr.mxu0 0.0
  %448 = vmatpush2.msra.mxu0 0.0
  %449 = vmatprep.subr.mxu0 0.0
  %450 = vmatpush2.msra.mxu0 0.0
  %451 = vmatprep.subr.mxu0 0.0
  %452 = vmatpush2.msra.mxu0 0.0
  %453 = vmatprep.subr.mxu0 0.0
  %454 = vmatpush2.msra.mxu0 0.0
  %455 = vmatprep.subr.mxu0 0.0
  %456 = vmatpush2.msra.mxu0 0.0
  %457 = vmatprep.subr.mxu0 0.0
  %458 = vmatpush2.msra.mxu0 0.0
  %459 = vmatprep.subr.mxu0 0.0
  %460 = vmatpush2.msra.mxu0 0.0
  %461 = vmatprep.mubr.f32.mxu0 0.0
  %462 = vmatmul.mubr.f32.gmra.mxu0 %v395
  %v463 = vpop.f32.mrf.mxu0
  %v464 = vadd.f32 0.0, %v463
  %v465 = vpop.f32.mrf.mxu0
  %466 = vdwg.mxu0
  %v467 = vadd.f32 %v154, %v464
  %v468 = vxor.u32 %v467, 2147483648
  %v469 = vmul.f32 %v468, 1.442695
  %v470 = vpow.pop %v469
  %v471 = vadd.f32 %v470, 1.0
  %v472 = vrcp.pop %v471
  %v473 = vmul.f32 1.0, %v472
  %v474 = vtanh.pop %v467
  %v475 = vmul.f32 %v473, %v385
  %477 = vrot.lane.b32.xlu0 %v474, 64
  %v478 = vpop.permute.xlu0 %477
  %v480 = vmul.f32 %v473, %v478
  %482 = vrot.lane.b32.xlu0 %v480, 32
  %v483 = vpop.permute.xlu0 %482
  %v485 = vadd.f32 %v475, %v483
  %v486 = vtanh.pop %v485
  %488 = vrot.lane.b32.xlu0 %v486, 64
  %v489 = vpop.permute.xlu0 %488
  %v491 = vmul.f32 %v473, %v489
  %493 = vrot.lane.b32.xlu0 %v491, 32
  %v494 = vpop.permute.xlu0 %493
  %v495 = vsel %vm293, %v494, 0
  %497 = vmatprep.subr.mxu0 0.0
  %498 = vmatpush1.msra.mxu0 0.0
  %499 = vmatprep.subr.mxu0 0.0
  %500 = vmatpush1.msra.mxu0 0.0
  %501 = vmatprep.subr.mxu0 0.0
  %502 = vmatpush1.msra.mxu0 0.0
  %503 = vmatprep.subr.mxu0 0.0
  %504 = vmatpush1.msra.mxu0 0.0
  %505 = vmatprep.subr.mxu0 0.0
  %506 = vmatpush1.msra.mxu0 0.0
  %507 = vmatprep.subr.mxu0 0.0
  %508 = vmatpush1.msra.mxu0 0.0
  %509 = vmatprep.subr.mxu0 0.0
  %510 = vmatpush1.msra.mxu0 0.0
  %511 = vmatprep.subr.mxu0 0.0
  %512 = vmatpush1.msra.mxu0 0.0
  %513 = vmatprep.subr.mxu0 0.0
  %514 = vmatpush1.msra.mxu0 0.0
  %515 = vmatprep.subr.mxu0 0.0
  %516 = vmatpush1.msra.mxu0 0.0
  %517 = vmatprep.subr.mxu0 0.0
  %518 = vmatpush1.msra.mxu0 0.0
  %519 = vmatprep.subr.mxu0 0.0
  %520 = vmatpush1.msra.mxu0 0.0
  %521 = vmatprep.subr.mxu0 0.0
  %522 = vmatpush1.msra.mxu0 %v32
  %523 = vmatprep.subr.mxu0 0.0
  %524 = vmatpush1.msra.mxu0 %v31
  %525 = vmatprep.subr.mxu0 0.0
  %526 = vmatpush1.msra.mxu0 %v30
  %527 = vmatprep.subr.mxu0 0.0
  %528 = vmatpush1.msra.mxu0 %v29
  %529 = vmatprep.subr.mxu0 0.0
  %530 = vmatpush2.msra.mxu0 0.0
  %531 = vmatprep.subr.mxu0 0.0
  %532 = vmatpush2.msra.mxu0 0.0
  %533 = vmatprep.subr.mxu0 0.0
  %534 = vmatpush2.msra.mxu0 0.0
  %535 = vmatprep.subr.mxu0 0.0
  %536 = vmatpush2.msra.mxu0 0.0
  %537 = vmatprep.subr.mxu0 0.0
  %538 = vmatpush2.msra.mxu0 0.0
  %539 = vmatprep.subr.mxu0 0.0
  %540 = vmatpush2.msra.mxu0 0.0
  %541 = vmatprep.subr.mxu0 0.0
  %542 = vmatpush2.msra.mxu0 0.0
  %543 = vmatprep.subr.mxu0 0.0
  %544 = vmatpush2.msra.mxu0 0.0
  %545 = vmatprep.subr.mxu0 0.0
  %546 = vmatpush2.msra.mxu0 0.0
  %547 = vmatprep.subr.mxu0 0.0
  %548 = vmatpush2.msra.mxu0 0.0
  %549 = vmatprep.subr.mxu0 0.0
  %550 = vmatpush2.msra.mxu0 0.0
  %551 = vmatprep.subr.mxu0 0.0
  %552 = vmatpush2.msra.mxu0 0.0
  %553 = vmatprep.subr.mxu0 0.0
  %554 = vmatpush2.msra.mxu0 0.0
  %555 = vmatprep.subr.mxu0 0.0
  %556 = vmatpush2.msra.mxu0 0.0
  %557 = vmatprep.subr.mxu0 0.0
  %558 = vmatpush2.msra.mxu0 0.0
  %559 = vmatprep.subr.mxu0 0.0
  %560 = vmatpush2.msra.mxu0 0.0
  %561 = vmatprep.mubr.f32.mxu0 0.0
  %562 = vmatmul.mubr.f32.gmra.mxu0 %v495
  %v563 = vpop.f32.mrf.mxu0
  %v564 = vadd.f32 0.0, %v563
  %v565 = vpop.f32.mrf.mxu0
  %566 = vdwg.mxu0
  %v567 = vadd.f32 %v159, %v564
  %v568 = vxor.u32 %v567, 2147483648
  %v569 = vmul.f32 %v568, 1.442695
  %v570 = vpow.pop %v569
  %v571 = vadd.f32 %v570, 1.0
  %v572 = vrcp.pop %v571
  %v573 = vmul.f32 1.0, %v572
  %v574 = vtanh.pop %v567
  %v575 = vmul.f32 %v573, %v485
  %577 = vrot.lane.b32.xlu0 %v574, 64
  %v578 = vpop.permute.xlu0 %577
  %v580 = vmul.f32 %v573, %v578
  %582 = vrot.lane.b32.xlu0 %v580, 32
  %v583 = vpop.permute.xlu0 %582
  %v585 = vadd.f32 %v575, %v583
  %v586 = vtanh.pop %v585
  %588 = vrot.lane.b32.xlu0 %v586, 64
  %v589 = vpop.permute.xlu0 %588
  %v591 = vmul.f32 %v573, %v589
  %593 = vrot.lane.b32.xlu0 %v591, 32
  %v594 = vpop.permute.xlu0 %593
  %v595 = vsel %vm293, %v594, 0
  %597 = vmatprep.subr.mxu0 0.0
  %598 = vmatpush1.msra.mxu0 0.0
  %599 = vmatprep.subr.mxu0 0.0
  %600 = vmatpush1.msra.mxu0 0.0
  %601 = vmatprep.subr.mxu0 0.0
  %602 = vmatpush1.msra.mxu0 0.0
  %603 = vmatprep.subr.mxu0 0.0
  %604 = vmatpush1.msra.mxu0 0.0
  %605 = vmatprep.subr.mxu0 0.0
  %606 = vmatpush1.msra.mxu0 0.0
  %607 = vmatprep.subr.mxu0 0.0
  %608 = vmatpush1.msra.mxu0 0.0
  %609 = vmatprep.subr.mxu0 0.0
  %610 = vmatpush1.msra.mxu0 0.0
  %611 = vmatprep.subr.mxu0 0.0
  %612 = vmatpush1.msra.mxu0 0.0
  %613 = vmatprep.subr.mxu0 0.0
  %614 = vmatpush1.msra.mxu0 0.0
  %615 = vmatprep.subr.mxu0 0.0
  %616 = vmatpush1.msra.mxu0 0.0
  %617 = vmatprep.subr.mxu0 0.0
  %618 = vmatpush1.msra.mxu0 0.0
  %619 = vmatprep.subr.mxu0 0.0
  %620 = vmatpush1.msra.mxu0 0.0
  %621 = vmatprep.subr.mxu0 0.0
  %622 = vmatpush1.msra.mxu0 %v32
  %623 = vmatprep.subr.mxu0 0.0
  %624 = vmatpush1.msra.mxu0 %v31
  %625 = vmatprep.subr.mxu0 0.0
  %626 = vmatpush1.msra.mxu0 %v30
  %627 = vmatprep.subr.mxu0 0.0
  %628 = vmatpush1.msra.mxu0 %v29
  %629 = vmatprep.subr.mxu0 0.0
  %630 = vmatpush2.msra.mxu0 0.0
  %631 = vmatprep.subr.mxu0 0.0
  %632 = vmatpush2.msra.mxu0 0.0
  %633 = vmatprep.subr.mxu0 0.0
  %634 = vmatpush2.msra.mxu0 0.0
  %635 = vmatprep.subr.mxu0 0.0
  %636 = vmatpush2.msra.mxu0 0.0
  %637 = vmatprep.subr.mxu0 0.0
  %638 = vmatpush2.msra.mxu0 0.0
  %639 = vmatprep.subr.mxu0 0.0
  %640 = vmatpush2.msra.mxu0 0.0
  %641 = vmatprep.subr.mxu0 0.0
  %642 = vmatpush2.msra.mxu0 0.0
  %643 = vmatprep.subr.mxu0 0.0
  %644 = vmatpush2.msra.mxu0 0.0
  %645 = vmatprep.subr.mxu0 0.0
  %646 = vmatpush2.msra.mxu0 0.0
  %647 = vmatprep.subr.mxu0 0.0
  %648 = vmatpush2.msra.mxu0 0.0
  %649 = vmatprep.subr.mxu0 0.0
  %650 = vmatpush2.msra.mxu0 0.0
  %651 = vmatprep.subr.mxu0 0.0
  %652 = vmatpush2.msra.mxu0 0.0
  %653 = vmatprep.subr.mxu0 0.0
  %654 = vmatpush2.msra.mxu0 0.0
  %655 = vmatprep.subr.mxu0 0.0
  %656 = vmatpush2.msra.mxu0 0.0
  %657 = vmatprep.subr.mxu0 0.0
  %658 = vmatpush2.msra.mxu0 0.0
  %659 = vmatprep.subr.mxu0 0.0
  %660 = vmatpush2.msra.mxu0 0.0
  %661 = vmatprep.mubr.f32.mxu0 0.0
  %662 = vmatmul.mubr.f32.gmra.mxu0 %v595
  %v663 = vpop.f32.mrf.mxu0
  %v664 = vadd.f32 0.0, %v663
  %v665 = vpop.f32.mrf.mxu0
  %666 = vdwg.mxu0
  %v667 = vadd.f32 %v164, %v664
  %v668 = vxor.u32 %v667, 2147483648
  %v669 = vmul.f32 %v668, 1.442695
  %v670 = vpow.pop %v669
  %v671 = vadd.f32 %v670, 1.0
  %v672 = vrcp.pop %v671
  %v673 = vmul.f32 1.0, %v672
  %v674 = vtanh.pop %v667
  %v675 = vmul.f32 %v673, %v585
  %677 = vrot.lane.b32.xlu0 %v674, 64
  %v678 = vpop.permute.xlu0 %677
  %v680 = vmul.f32 %v673, %v678
  %682 = vrot.lane.b32.xlu0 %v680, 32
  %v683 = vpop.permute.xlu0 %682
  %v685 = vadd.f32 %v675, %v683
  %v686 = vtanh.pop %v685
  %688 = vrot.lane.b32.xlu0 %v686, 64
  %v689 = vpop.permute.xlu0 %688
  %v691 = vmul.f32 %v673, %v689
  %693 = vrot.lane.b32.xlu0 %v691, 32
  %v694 = vpop.permute.xlu0 %693
  %v695 = vsel %vm293, %v694, 0
  %697 = vmatprep.subr.mxu0 0.0
  %698 = vmatpush1.msra.mxu0 0.0
  %699 = vmatprep.subr.mxu0 0.0
  %700 = vmatpush1.msra.mxu0 0.0
  %701 = vmatprep.subr.mxu0 0.0
  %702 = vmatpush1.msra.mxu0 0.0
  %703 = vmatprep.subr.mxu0 0.0
  %704 = vmatpush1.msra.mxu0 0.0
  %705 = vmatprep.subr.mxu0 0.0
  %706 = vmatpush1.msra.mxu0 0.0
  %707 = vmatprep.subr.mxu0 0.0
  %708 = vmatpush1.msra.mxu0 0.0
  %709 = vmatprep.subr.mxu0 0.0
  %710 = vmatpush1.msra.mxu0 0.0
  %711 = vmatprep.subr.mxu0 0.0
  %712 = vmatpush1.msra.mxu0 0.0
  %713 = vmatprep.subr.mxu0 0.0
  %714 = vmatpush1.msra.mxu0 0.0
  %715 = vmatprep.subr.mxu0 0.0
  %716 = vmatpush1.msra.mxu0 0.0
  %717 = vmatprep.subr.mxu0 0.0
  %718 = vmatpush1.msra.mxu0 0.0
  %719 = vmatprep.subr.mxu0 0.0
  %720 = vmatpush1.msra.mxu0 0.0
  %721 = vmatprep.subr.mxu0 0.0
  %722 = vmatpush1.msra.mxu0 %v32
  %723 = vmatprep.subr.mxu0 0.0
  %724 = vmatpush1.msra.mxu0 %v31
  %725 = vmatprep.subr.mxu0 0.0
  %726 = vmatpush1.msra.mxu0 %v30
  %727 = vmatprep.subr.mxu0 0.0
  %728 = vmatpush1.msra.mxu0 %v29
  %729 = vmatprep.subr.mxu0 0.0
  %730 = vmatpush2.msra.mxu0 0.0
  %731 = vmatprep.subr.mxu0 0.0
  %732 = vmatpush2.msra.mxu0 0.0
  %733 = vmatprep.subr.mxu0 0.0
  %734 = vmatpush2.msra.mxu0 0.0
  %735 = vmatprep.subr.mxu0 0.0
  %736 = vmatpush2.msra.mxu0 0.0
  %737 = vmatprep.subr.mxu0 0.0
  %738 = vmatpush2.msra.mxu0 0.0
  %739 = vmatprep.subr.mxu0 0.0
  %740 = vmatpush2.msra.mxu0 0.0
  %741 = vmatprep.subr.mxu0 0.0
  %742 = vmatpush2.msra.mxu0 0.0
  %743 = vmatprep.subr.mxu0 0.0
  %744 = vmatpush2.msra.mxu0 0.0
  %745 = vmatprep.subr.mxu0 0.0
  %746 = vmatpush2.msra.mxu0 0.0
  %747 = vmatprep.subr.mxu0 0.0
  %748 = vmatpush2.msra.mxu0 0.0
  %749 = vmatprep.subr.mxu0 0.0
  %750 = vmatpush2.msra.mxu0 0.0
  %751 = vmatprep.subr.mxu0 0.0
  %752 = vmatpush2.msra.mxu0 0.0
  %753 = vmatprep.subr.mxu0 0.0
  %754 = vmatpush2.msra.mxu0 0.0
  %755 = vmatprep.subr.mxu0 0.0
  %756 = vmatpush2.msra.mxu0 0.0
  %757 = vmatprep.subr.mxu0 0.0
  %758 = vmatpush2.msra.mxu0 0.0
  %759 = vmatprep.subr.mxu0 0.0
  %760 = vmatpush2.msra.mxu0 0.0
  %761 = vmatprep.mubr.f32.mxu0 0.0
  %762 = vmatmul.mubr.f32.gmra.mxu0 %v695
  %v763 = vpop.f32.mrf.mxu0
  %v764 = vadd.f32 0.0, %v763
  %v765 = vpop.f32.mrf.mxu0
  %766 = vdwg.mxu0
  %v767 = vadd.f32 %v169, %v764
  %v768 = vxor.u32 %v767, 2147483648
  %v769 = vmul.f32 %v768, 1.442695
  %v770 = vpow.pop %v769
  %v771 = vadd.f32 %v770, 1.0
  %v772 = vrcp.pop %v771
  %v773 = vmul.f32 1.0, %v772
  %v774 = vtanh.pop %v767
  %v775 = vmul.f32 %v773, %v685
  %777 = vrot.lane.b32.xlu0 %v774, 64
  %v778 = vpop.permute.xlu0 %777
  %v780 = vmul.f32 %v773, %v778
  %782 = vrot.lane.b32.xlu0 %v780, 32
  %v783 = vpop.permute.xlu0 %782
  %v785 = vadd.f32 %v775, %v783
  %v786 = vtanh.pop %v785
  %788 = vrot.lane.b32.xlu0 %v786, 64
  %v789 = vpop.permute.xlu0 %788
  %v791 = vmul.f32 %v773, %v789
  %793 = vrot.lane.b32.xlu0 %v791, 32
  %v794 = vpop.permute.xlu0 %793
  %v795 = vsel %vm293, %v794, 0
  %797 = vmatprep.subr.mxu0 0.0
  %798 = vmatpush1.msra.mxu0 0.0
  %799 = vmatprep.subr.mxu0 0.0
  %800 = vmatpush1.msra.mxu0 0.0
  %801 = vmatprep.subr.mxu0 0.0
  %802 = vmatpush1.msra.mxu0 0.0
  %803 = vmatprep.subr.mxu0 0.0
  %804 = vmatpush1.msra.mxu0 0.0
  %805 = vmatprep.subr.mxu0 0.0
  %806 = vmatpush1.msra.mxu0 0.0
  %807 = vmatprep.subr.mxu0 0.0
  %808 = vmatpush1.msra.mxu0 0.0
  %809 = vmatprep.subr.mxu0 0.0
  %810 = vmatpush1.msra.mxu0 0.0
  %811 = vmatprep.subr.mxu0 0.0
  %812 = vmatpush1.msra.mxu0 0.0
  %813 = vmatprep.subr.mxu0 0.0
  %814 = vmatpush1.msra.mxu0 0.0
  %815 = vmatprep.subr.mxu0 0.0
  %816 = vmatpush1.msra.mxu0 0.0
  %817 = vmatprep.subr.mxu0 0.0
  %818 = vmatpush1.msra.mxu0 0.0
  %819 = vmatprep.subr.mxu0 0.0
  %820 = vmatpush1.msra.mxu0 0.0
  %821 = vmatprep.subr.mxu0 0.0
  %822 = vmatpush1.msra.mxu0 %v32
  %823 = vmatprep.subr.mxu0 0.0
  %824 = vmatpush1.msra.mxu0 %v31
  %825 = vmatprep.subr.mxu0 0.0
  %826 = vmatpush1.msra.mxu0 %v30
  %827 = vmatprep.subr.mxu0 0.0
  %828 = vmatpush1.msra.mxu0 %v29
  %829 = vmatprep.subr.mxu0 0.0
  %830 = vmatpush2.msra.mxu0 0.0
  %831 = vmatprep.subr.mxu0 0.0
  %832 = vmatpush2.msra.mxu0 0.0
  %833 = vmatprep.subr.mxu0 0.0
  %834 = vmatpush2.msra.mxu0 0.0
  %835 = vmatprep.subr.mxu0 0.0
  %836 = vmatpush2.msra.mxu0 0.0
  %837 = vmatprep.subr.mxu0 0.0
  %838 = vmatpush2.msra.mxu0 0.0
  %839 = vmatprep.subr.mxu0 0.0
  %840 = vmatpush2.msra.mxu0 0.0
  %841 = vmatprep.subr.mxu0 0.0
  %842 = vmatpush2.msra.mxu0 0.0
  %843 = vmatprep.subr.mxu0 0.0
  %844 = vmatpush2.msra.mxu0 0.0
  %845 = vmatprep.subr.mxu0 0.0
  %846 = vmatpush2.msra.mxu0 0.0
  %847 = vmatprep.subr.mxu0 0.0
  %848 = vmatpush2.msra.mxu0 0.0
  %849 = vmatprep.subr.mxu0 0.0
  %850 = vmatpush2.msra.mxu0 0.0
  %851 = vmatprep.subr.mxu0 0.0
  %852 = vmatpush2.msra.mxu0 0.0
  %853 = vmatprep.subr.mxu0 0.0
  %854 = vmatpush2.msra.mxu0 0.0
  %855 = vmatprep.subr.mxu0 0.0
  %856 = vmatpush2.msra.mxu0 0.0
  %857 = vmatprep.subr.mxu0 0.0
  %858 = vmatpush2.msra.mxu0 0.0
  %859 = vmatprep.subr.mxu0 0.0
  %860 = vmatpush2.msra.mxu0 0.0
  %861 = vmatprep.mubr.f32.mxu0 0.0
  %862 = vmatmul.mubr.f32.gmra.mxu0 %v795
  %v863 = vpop.f32.mrf.mxu0
  %v864 = vadd.f32 0.0, %v863
  %v865 = vpop.f32.mrf.mxu0
  %866 = vdwg.mxu0
  %v867 = vadd.f32 %v174, %v864
  %v868 = vxor.u32 %v867, 2147483648
  %v869 = vmul.f32 %v868, 1.442695
  %v870 = vpow.pop %v869
  %v871 = vadd.f32 %v870, 1.0
  %v872 = vrcp.pop %v871
  %v873 = vmul.f32 1.0, %v872
  %v874 = vtanh.pop %v867
  %v875 = vmul.f32 %v873, %v785
  %877 = vrot.lane.b32.xlu0 %v874, 64
  %v878 = vpop.permute.xlu0 %877
  %v880 = vmul.f32 %v873, %v878
  %882 = vrot.lane.b32.xlu0 %v880, 32
  %v883 = vpop.permute.xlu0 %882
  %v885 = vadd.f32 %v875, %v883
  %v886 = vtanh.pop %v885
  %888 = vrot.lane.b32.xlu0 %v886, 64
  %v889 = vpop.permute.xlu0 %888
  %v891 = vmul.f32 %v873, %v889
  %893 = vrot.lane.b32.xlu0 %v891, 32
  %v894 = vpop.permute.xlu0 %893
  %v895 = vsel %vm293, %v894, 0
  %897 = vmatprep.subr.mxu0 0.0
  %898 = vmatpush1.msra.mxu0 0.0
  %899 = vmatprep.subr.mxu0 0.0
  %900 = vmatpush1.msra.mxu0 0.0
  %901 = vmatprep.subr.mxu0 0.0
  %902 = vmatpush1.msra.mxu0 0.0
  %903 = vmatprep.subr.mxu0 0.0
  %904 = vmatpush1.msra.mxu0 0.0
  %905 = vmatprep.subr.mxu0 0.0
  %906 = vmatpush1.msra.mxu0 0.0
  %907 = vmatprep.subr.mxu0 0.0
  %908 = vmatpush1.msra.mxu0 0.0
  %909 = vmatprep.subr.mxu0 0.0
  %910 = vmatpush1.msra.mxu0 0.0
  %911 = vmatprep.subr.mxu0 0.0
  %912 = vmatpush1.msra.mxu0 0.0
  %913 = vmatprep.subr.mxu0 0.0
  %914 = vmatpush1.msra.mxu0 0.0
  %915 = vmatprep.subr.mxu0 0.0
  %916 = vmatpush1.msra.mxu0 0.0
  %917 = vmatprep.subr.mxu0 0.0
  %918 = vmatpush1.msra.mxu0 0.0
  %919 = vmatprep.subr.mxu0 0.0
  %920 = vmatpush1.msra.mxu0 0.0
  %921 = vmatprep.subr.mxu0 0.0
  %922 = vmatpush1.msra.mxu0 %v32
  %923 = vmatprep.subr.mxu0 0.0
  %924 = vmatpush1.msra.mxu0 %v31
  %925 = vmatprep.subr.mxu0 0.0
  %926 = vmatpush1.msra.mxu0 %v30
  %927 = vmatprep.subr.mxu0 0.0
  %928 = vmatpush1.msra.mxu0 %v29
  %929 = vmatprep.subr.mxu0 0.0
  %930 = vmatpush2.msra.mxu0 0.0
  %931 = vmatprep.subr.mxu0 0.0
  %932 = vmatpush2.msra.mxu0 0.0
  %933 = vmatprep.subr.mxu0 0.0
  %934 = vmatpush2.msra.mxu0 0.0
  %935 = vmatprep.subr.mxu0 0.0
  %936 = vmatpush2.msra.mxu0 0.0
  %937 = vmatprep.subr.mxu0 0.0
  %938 = vmatpush2.msra.mxu0 0.0
  %939 = vmatprep.subr.mxu0 0.0
  %940 = vmatpush2.msra.mxu0 0.0
  %941 = vmatprep.subr.mxu0 0.0
  %942 = vmatpush2.msra.mxu0 0.0
  %943 = vmatprep.subr.mxu0 0.0
  %944 = vmatpush2.msra.mxu0 0.0
  %945 = vmatprep.subr.mxu0 0.0
  %946 = vmatpush2.msra.mxu0 0.0
  %947 = vmatprep.subr.mxu0 0.0
  %948 = vmatpush2.msra.mxu0 0.0
  %949 = vmatprep.subr.mxu0 0.0
  %950 = vmatpush2.msra.mxu0 0.0
  %951 = vmatprep.subr.mxu0 0.0
  %952 = vmatpush2.msra.mxu0 0.0
  %953 = vmatprep.subr.mxu0 0.0
  %954 = vmatpush2.msra.mxu0 0.0
  %955 = vmatprep.subr.mxu0 0.0
  %956 = vmatpush2.msra.mxu0 0.0
  %957 = vmatprep.subr.mxu0 0.0
  %958 = vmatpush2.msra.mxu0 0.0
  %959 = vmatprep.subr.mxu0 0.0
  %960 = vmatpush2.msra.mxu0 0.0
  %961 = vmatprep.mubr.f32.mxu0 0.0
  %962 = vmatmul.mubr.f32.gmra.mxu0 %v895
  %v963 = vpop.f32.mrf.mxu0
  %v964 = vadd.f32 0.0, %v963
  %v965 = vpop.f32.mrf.mxu0
  %966 = vdwg.mxu0
  %v967 = vadd.f32 %v179, %v964
  %v968 = vxor.u32 %v967, 2147483648
  %v969 = vmul.f32 %v968, 1.442695
  %v970 = vpow.pop %v969
  %v971 = vadd.f32 %v970, 1.0
  %v972 = vrcp.pop %v971
  %v973 = vmul.f32 1.0, %v972
  %v974 = vtanh.pop %v967
  %v975 = vmul.f32 %v973, %v885
  %977 = vrot.lane.b32.xlu0 %v974, 64
  %v978 = vpop.permute.xlu0 %977
  %v980 = vmul.f32 %v973, %v978
  %982 = vrot.lane.b32.xlu0 %v980, 32
  %v983 = vpop.permute.xlu0 %982
  %v985 = vadd.f32 %v975, %v983
  %v986 = vtanh.pop %v985
  %988 = vrot.lane.b32.xlu0 %v986, 64
  %v989 = vpop.permute.xlu0 %988
  %v991 = vmul.f32 %v973, %v989
  %993 = vrot.lane.b32.xlu0 %v991, 32
  %v994 = vpop.permute.xlu0 %993
  %v995 = vsel %vm293, %v994, 0
  %997 = vmatprep.subr.mxu0 0.0
  %998 = vmatpush1.msra.mxu0 0.0
  %999 = vmatprep.subr.mxu0 0.0
  %1000 = vmatpush1.msra.mxu0 0.0
  %1001 = vmatprep.subr.mxu0 0.0
  %1002 = vmatpush1.msra.mxu0 0.0
  %1003 = vmatprep.subr.mxu0 0.0
  %1004 = vmatpush1.msra.mxu0 0.0
  %1005 = vmatprep.subr.mxu0 0.0
  %1006 = vmatpush1.msra.mxu0 0.0
  %1007 = vmatprep.subr.mxu0 0.0
  %1008 = vmatpush1.msra.mxu0 0.0
  %1009 = vmatprep.subr.mxu0 0.0
  %1010 = vmatpush1.msra.mxu0 0.0
  %1011 = vmatprep.subr.mxu0 0.0
  %1012 = vmatpush1.msra.mxu0 0.0
  %1013 = vmatprep.subr.mxu0 0.0
  %1014 = vmatpush1.msra.mxu0 0.0
  %1015 = vmatprep.subr.mxu0 0.0
  %1016 = vmatpush1.msra.mxu0 0.0
  %1017 = vmatprep.subr.mxu0 0.0
  %1018 = vmatpush1.msra.mxu0 0.0
  %1019 = vmatprep.subr.mxu0 0.0
  %1020 = vmatpush1.msra.mxu0 0.0
  %1021 = vmatprep.subr.mxu0 0.0
  %1022 = vmatpush1.msra.mxu0 %v32
  %1023 = vmatprep.subr.mxu0 0.0
  %1024 = vmatpush1.msra.mxu0 %v31
  %1025 = vmatprep.subr.mxu0 0.0
  %1026 = vmatpush1.msra.mxu0 %v30
  %1027 = vmatprep.subr.mxu0 0.0
  %1028 = vmatpush1.msra.mxu0 %v29
  %1029 = vmatprep.subr.mxu0 0.0
  %1030 = vmatpush2.msra.mxu0 0.0
  %1031 = vmatprep.subr.mxu0 0.0
  %1032 = vmatpush2.msra.mxu0 0.0
  %1033 = vmatprep.subr.mxu0 0.0
  %1034 = vmatpush2.msra.mxu0 0.0
  %1035 = vmatprep.subr.mxu0 0.0
  %1036 = vmatpush2.msra.mxu0 0.0
  %1037 = vmatprep.subr.mxu0 0.0
  %1038 = vmatpush2.msra.mxu0 0.0
  %1039 = vmatprep.subr.mxu0 0.0
  %1040 = vmatpush2.msra.mxu0 0.0
  %1041 = vmatprep.subr.mxu0 0.0
  %1042 = vmatpush2.msra.mxu0 0.0
  %1043 = vmatprep.subr.mxu0 0.0
  %1044 = vmatpush2.msra.mxu0 0.0
  %1045 = vmatprep.subr.mxu0 0.0
  %1046 = vmatpush2.msra.mxu0 0.0
  %1047 = vmatprep.subr.mxu0 0.0
  %1048 = vmatpush2.msra.mxu0 0.0
  %1049 = vmatprep.subr.mxu0 0.0
  %1050 = vmatpush2.msra.mxu0 0.0
  %1051 = vmatprep.subr.mxu0 0.0
  %1052 = vmatpush2.msra.mxu0 0.0
  %1053 = vmatprep.subr.mxu0 0.0
  %1054 = vmatpush2.msra.mxu0 0.0
  %1055 = vmatprep.subr.mxu0 0.0
  %1056 = vmatpush2.msra.mxu0 0.0
  %1057 = vmatprep.subr.mxu0 0.0
  %1058 = vmatpush2.msra.mxu0 0.0
  %1059 = vmatprep.subr.mxu0 0.0
  %1060 = vmatpush2.msra.mxu0 0.0
  %1061 = vmatprep.mubr.f32.mxu0 0.0
  %1062 = vmatmul.mubr.f32.gmra.mxu0 %v995
  %v1063 = vpop.f32.mrf.mxu0
  %v1064 = vadd.f32 0.0, %v1063
  %v1065 = vpop.f32.mrf.mxu0
  %1066 = vdwg.mxu0
  %v1067 = vadd.f32 %v184, %v1064
  %v1068 = vxor.u32 %v1067, 2147483648
  %v1069 = vmul.f32 %v1068, 1.442695
  %v1070 = vpow.pop %v1069
  %v1071 = vadd.f32 %v1070, 1.0
  %v1072 = vrcp.pop %v1071
  %v1073 = vmul.f32 1.0, %v1072
  %v1074 = vtanh.pop %v1067
  %v1075 = vmul.f32 %v1073, %v985
  %1077 = vrot.lane.b32.xlu0 %v1074, 64
  %v1078 = vpop.permute.xlu0 %1077
  %v1080 = vmul.f32 %v1073, %v1078
  %1082 = vrot.lane.b32.xlu0 %v1080, 32
  %v1083 = vpop.permute.xlu0 %1082
  %v1085 = vadd.f32 %v1075, %v1083
  %v1086 = vtanh.pop %v1085
  %1088 = vrot.lane.b32.xlu0 %v1086, 64
  %v1089 = vpop.permute.xlu0 %1088
  %v1091 = vmul.f32 %v1073, %v1089
  %v1093 = vlaneseq
  %v1094 = vshrl.u32 %v1093, 7
  %v1095 = vsub.s32 0, %v1094
  %v1096 = vrot.slane %v38, %v1095
  %1099 = vrot.lane.b32.xlu0 %v1091, 32
  %v1100 = vpop.permute.xlu0 %1099
  %v1101 = vsel %vm293, %v1100, 0
  %1103 = vmatprep.subr.mxu0 0.0
  %1104 = vmatpush1.msra.mxu0 0.0
  %1105 = vmatprep.subr.mxu0 0.0
  %1106 = vmatpush1.msra.mxu0 0.0
  %1107 = vmatprep.subr.mxu0 0.0
  %1108 = vmatpush1.msra.mxu0 0.0
  %1109 = vmatprep.subr.mxu0 0.0
  %1110 = vmatpush1.msra.mxu0 0.0
  %1111 = vmatprep.subr.mxu0 0.0
  %1112 = vmatpush1.msra.mxu0 0.0
  %1113 = vmatprep.subr.mxu0 0.0
  %1114 = vmatpush1.msra.mxu0 0.0
  %1115 = vmatprep.subr.mxu0 0.0
  %1116 = vmatpush1.msra.mxu0 0.0
  %1117 = vmatprep.subr.mxu0 0.0
  %1118 = vmatpush1.msra.mxu0 0.0
  %1119 = vmatprep.subr.mxu0 0.0
  %1120 = vmatpush1.msra.mxu0 0.0
  %1121 = vmatprep.subr.mxu0 0.0
  %1122 = vmatpush1.msra.mxu0 0.0
  %1123 = vmatprep.subr.mxu0 0.0
  %1124 = vmatpush1.msra.mxu0 0.0
  %1125 = vmatprep.subr.mxu0 0.0
  %1126 = vmatpush1.msra.mxu0 0.0
  %1127 = vmatprep.subr.mxu0 0.0
  %1128 = vmatpush1.msra.mxu0 %v37
  %1129 = vmatprep.subr.mxu0 0.0
  %1130 = vmatpush1.msra.mxu0 %v36
  %1131 = vmatprep.subr.mxu0 0.0
  %1132 = vmatpush1.msra.mxu0 %v35
  %1133 = vmatprep.subr.mxu0 0.0
  %1134 = vmatpush1.msra.mxu0 %v34
  %1135 = vmatprep.subr.mxu0 0.0
  %1136 = vmatpush2.msra.mxu0 0.0
  %1137 = vmatprep.subr.mxu0 0.0
  %1138 = vmatpush2.msra.mxu0 0.0
  %1139 = vmatprep.subr.mxu0 0.0
  %1140 = vmatpush2.msra.mxu0 0.0
  %1141 = vmatprep.subr.mxu0 0.0
  %1142 = vmatpush2.msra.mxu0 0.0
  %1143 = vmatprep.subr.mxu0 0.0
  %1144 = vmatpush2.msra.mxu0 0.0
  %1145 = vmatprep.subr.mxu0 0.0
  %1146 = vmatpush2.msra.mxu0 0.0
  %1147 = vmatprep.subr.mxu0 0.0
  %1148 = vmatpush2.msra.mxu0 0.0
  %1149 = vmatprep.subr.mxu0 0.0
  %1150 = vmatpush2.msra.mxu0 0.0
  %1151 = vmatprep.subr.mxu0 0.0
  %1152 = vmatpush2.msra.mxu0 0.0
  %1153 = vmatprep.subr.mxu0 0.0
  %1154 = vmatpush2.msra.mxu0 0.0
  %1155 = vmatprep.subr.mxu0 0.0
  %1156 = vmatpush2.msra.mxu0 0.0
  %1157 = vmatprep.subr.mxu0 0.0
  %1158 = vmatpush2.msra.mxu0 0.0
  %1159 = vmatprep.subr.mxu0 0.0
  %1160 = vmatpush2.msra.mxu0 0.0
  %1161 = vmatprep.subr.mxu0 0.0
  %1162 = vmatpush2.msra.mxu0 0.0
  %1163 = vmatprep.subr.mxu0 0.0
  %1164 = vmatpush2.msra.mxu0 0.0
  %1165 = vmatprep.subr.mxu0 0.0
  %1166 = vmatpush2.msra.mxu0 0.0
  %1167 = vmatprep.mubr.f32.mxu0 0.0
  %1168 = vmatmul.mubr.f32.gmra.mxu0 %v1101
  %v1169 = vpop.f32.mrf.mxu0
  %v1170 = vadd.f32 %v1096, %v1169
  %v1171 = vpop.f32.mrf.mxu0
  %1172 = vdwg.mxu0
  %1174 = vset.pattern.permute.xlu0 0
  %1175 = vperm.xlu0 %1174, %v1170
  %v1176 = vpop.permute.xlu0 %1175
  %v1178 = vlaneseq
  %v1179 = vshrl.u32 %v1178, 7
  %v1180 = vsub.s32 0, %v1179
  %v1181 = vrot.slane %v28, %v1180
  %v1182 = vmul.f32 %v1176, %v1181
  %v1183 = vadd.f32 %v275, %v1182
  %1184 = vmatprep.subr.mxu0 0.0
  %1185 = vmatpush1.msra.mxu0 0.0
  %1186 = vmatprep.subr.mxu0 0.0
  %1187 = vmatpush1.msra.mxu0 0.0
  %1188 = vmatprep.subr.mxu0 0.0
  %1189 = vmatpush1.msra.mxu0 0.0
  %1190 = vmatprep.subr.mxu0 0.0
  %1191 = vmatpush1.msra.mxu0 0.0
  %1192 = vmatprep.subr.mxu0 0.0
  %1193 = vmatpush1.msra.mxu0 0.0
  %1194 = vmatprep.subr.mxu0 0.0
  %1195 = vmatpush1.msra.mxu0 0.0
  %1196 = vmatprep.subr.mxu0 0.0
  %1197 = vmatpush1.msra.mxu0 0.0
  %1198 = vmatprep.subr.mxu0 0.0
  %1199 = vmatpush1.msra.mxu0 0.0
  %1200 = vmatprep.subr.mxu0 0.0
  %1201 = vmatpush1.msra.mxu0 0.0
  %1202 = vmatprep.subr.mxu0 0.0
  %1203 = vmatpush1.msra.mxu0 0.0
  %1204 = vmatprep.subr.mxu0 0.0
  %1205 = vmatpush1.msra.mxu0 0.0
  %1206 = vmatprep.subr.mxu0 0.0
  %1207 = vmatpush1.msra.mxu0 0.0
  %1208 = vmatprep.subr.mxu0 0.0
  %1209 = vmatpush1.msra.mxu0 %v32
  %1210 = vmatprep.subr.mxu0 0.0
  %1211 = vmatpush1.msra.mxu0 %v31
  %1212 = vmatprep.subr.mxu0 0.0
  %1213 = vmatpush1.msra.mxu0 %v30
  %1214 = vmatprep.subr.mxu0 0.0
  %1215 = vmatpush1.msra.mxu0 %v29
  %1216 = vmatprep.subr.mxu0 0.0
  %1217 = vmatpush2.msra.mxu0 0.0
  %1218 = vmatprep.subr.mxu0 0.0
  %1219 = vmatpush2.msra.mxu0 0.0
  %1220 = vmatprep.subr.mxu0 0.0
  %1221 = vmatpush2.msra.mxu0 0.0
  %1222 = vmatprep.subr.mxu0 0.0
  %1223 = vmatpush2.msra.mxu0 0.0
  %1224 = vmatprep.subr.mxu0 0.0
  %1225 = vmatpush2.msra.mxu0 0.0
  %1226 = vmatprep.subr.mxu0 0.0
  %1227 = vmatpush2.msra.mxu0 0.0
  %1228 = vmatprep.subr.mxu0 0.0
  %1229 = vmatpush2.msra.mxu0 0.0
  %1230 = vmatprep.subr.mxu0 0.0
  %1231 = vmatpush2.msra.mxu0 0.0
  %1232 = vmatprep.subr.mxu0 0.0
  %1233 = vmatpush2.msra.mxu0 0.0
  %1234 = vmatprep.subr.mxu0 0.0
  %1235 = vmatpush2.msra.mxu0 0.0
  %1236 = vmatprep.subr.mxu0 0.0
  %1237 = vmatpush2.msra.mxu0 0.0
  %1238 = vmatprep.subr.mxu0 0.0
  %1239 = vmatpush2.msra.mxu0 0.0
  %1240 = vmatprep.subr.mxu0 0.0
  %1241 = vmatpush2.msra.mxu0 0.0
  %1242 = vmatprep.subr.mxu0 0.0
  %1243 = vmatpush2.msra.mxu0 0.0
  %1244 = vmatprep.subr.mxu0 0.0
  %1245 = vmatpush2.msra.mxu0 0.0
  %1246 = vmatprep.subr.mxu0 0.0
  %1247 = vmatpush2.msra.mxu0 0.0
  %1248 = vmatprep.mubr.f32.mxu0 0.0
  %1249 = vmatmul.mubr.f32.gmra.mxu0 %v1101
  %v1250 = vpop.f32.mrf.mxu0
  %v1251 = vadd.f32 0.0, %v1250
  %v1252 = vpop.f32.mrf.mxu0
  %1253 = vdwg.mxu0
  %v1254 = vadd.f32 %v1183, %v1251
  %v1255 = vxor.u32 %v1254, 2147483648
  %v1256 = vmul.f32 %v1255, 1.442695
  %v1257 = vpow.pop %v1256
  %v1258 = vadd.f32 %v1257, 1.0
  %v1259 = vrcp.pop %v1258
  %v1260 = vmul.f32 1.0, %v1259
  %v1261 = vtanh.pop %v1254
  %v1262 = vmul.f32 %v1260, %v1085
  %1264 = vrot.lane.b32.xlu0 %v1261, 64
  %v1265 = vpop.permute.xlu0 %1264
  %v1267 = vmul.f32 %v1260, %v1265
  %1269 = vrot.lane.b32.xlu0 %v1267, 32
  %v1270 = vpop.permute.xlu0 %1269
  %v1272 = vadd.f32 %v1262, %v1270
  %v1273 = vtanh.pop %v1272
  %1275 = vrot.lane.b32.xlu0 %v1273, 64
  %v1276 = vpop.permute.xlu0 %1275
  %v1278 = vmul.f32 %v1260, %v1276
  %1280 = vrot.lane.b32.xlu0 %v1278, 32
  %v1281 = vpop.permute.xlu0 %1280
  %v1282 = vsel %vm293, %v1281, 0
  %1284 = vmatprep.subr.mxu0 0.0
  %1285 = vmatpush1.msra.mxu0 0.0
  %1286 = vmatprep.subr.mxu0 0.0
  %1287 = vmatpush1.msra.mxu0 0.0
  %1288 = vmatprep.subr.mxu0 0.0
  %1289 = vmatpush1.msra.mxu0 0.0
  %1290 = vmatprep.subr.mxu0 0.0
  %1291 = vmatpush1.msra.mxu0 0.0
  %1292 = vmatprep.subr.mxu0 0.0
  %1293 = vmatpush1.msra.mxu0 0.0
  %1294 = vmatprep.subr.mxu0 0.0
  %1295 = vmatpush1.msra.mxu0 0.0
  %1296 = vmatprep.subr.mxu0 0.0
  %1297 = vmatpush1.msra.mxu0 0.0
  %1298 = vmatprep.subr.mxu0 0.0
  %1299 = vmatpush1.msra.mxu0 0.0
  %1300 = vmatprep.subr.mxu0 0.0
  %1301 = vmatpush1.msra.mxu0 0.0
  %1302 = vmatprep.subr.mxu0 0.0
  %1303 = vmatpush1.msra.mxu0 0.0
  %1304 = vmatprep.subr.mxu0 0.0
  %1305 = vmatpush1.msra.mxu0 0.0
  %1306 = vmatprep.subr.mxu0 0.0
  %1307 = vmatpush1.msra.mxu0 0.0
  %1308 = vmatprep.subr.mxu0 0.0
  %1309 = vmatpush1.msra.mxu0 %v37
  %1310 = vmatprep.subr.mxu0 0.0
  %1311 = vmatpush1.msra.mxu0 %v36
  %1312 = vmatprep.subr.mxu0 0.0
  %1313 = vmatpush1.msra.mxu0 %v35
  %1314 = vmatprep.subr.mxu0 0.0
  %1315 = vmatpush1.msra.mxu0 %v34
  %1316 = vmatprep.subr.mxu0 0.0
  %1317 = vmatpush2.msra.mxu0 0.0
  %1318 = vmatprep.subr.mxu0 0.0
  %1319 = vmatpush2.msra.mxu0 0.0
  %1320 = vmatprep.subr.mxu0 0.0
  %1321 = vmatpush2.msra.mxu0 0.0
  %1322 = vmatprep.subr.mxu0 0.0
  %1323 = vmatpush2.msra.mxu0 0.0
  %1324 = vmatprep.subr.mxu0 0.0
  %1325 = vmatpush2.msra.mxu0 0.0
  %1326 = vmatprep.subr.mxu0 0.0
  %1327 = vmatpush2.msra.mxu0 0.0
  %1328 = vmatprep.subr.mxu0 0.0
  %1329 = vmatpush2.msra.mxu0 0.0
  %1330 = vmatprep.subr.mxu0 0.0
  %1331 = vmatpush2.msra.mxu0 0.0
  %1332 = vmatprep.subr.mxu0 0.0
  %1333 = vmatpush2.msra.mxu0 0.0
  %1334 = vmatprep.subr.mxu0 0.0
  %1335 = vmatpush2.msra.mxu0 0.0
  %1336 = vmatprep.subr.mxu0 0.0
  %1337 = vmatpush2.msra.mxu0 0.0
  %1338 = vmatprep.subr.mxu0 0.0
  %1339 = vmatpush2.msra.mxu0 0.0
  %1340 = vmatprep.subr.mxu0 0.0
  %1341 = vmatpush2.msra.mxu0 0.0
  %1342 = vmatprep.subr.mxu0 0.0
  %1343 = vmatpush2.msra.mxu0 0.0
  %1344 = vmatprep.subr.mxu0 0.0
  %1345 = vmatpush2.msra.mxu0 0.0
  %1346 = vmatprep.subr.mxu0 0.0
  %1347 = vmatpush2.msra.mxu0 0.0
  %1348 = vmatprep.mubr.f32.mxu0 0.0
  %1349 = vmatmul.mubr.f32.gmra.mxu0 %v1282
  %v1350 = vpop.f32.mrf.mxu0
  %v1351 = vadd.f32 %v1096, %v1350
  %v1352 = vpop.f32.mrf.mxu0
  %1353 = vdwg.mxu0
  %vm1354 = vcmask 7168
  %1355 = vst.msk [vmem:[%s7] sm:$0xff] %vm1354, %v1351
  %1357 = vset.pattern.permute.xlu0 0
  %1358 = vperm.xlu0 %1357, %v1351
  %v1359 = vpop.permute.xlu0 %1358
  %v1361 = vmul.f32 %v1359, %v1181
  %v1362 = vadd.f32 %v280, %v1361
  %1363 = vmatprep.subr.mxu0 0.0
  %1364 = vmatpush1.msra.mxu0 0.0
  %1365 = vmatprep.subr.mxu0 0.0
  %1366 = vmatpush1.msra.mxu0 0.0
  %1367 = vmatprep.subr.mxu0 0.0
  %1368 = vmatpush1.msra.mxu0 0.0
  %1369 = vmatprep.subr.mxu0 0.0
  %1370 = vmatpush1.msra.mxu0 0.0
  %1371 = vmatprep.subr.mxu0 0.0
  %1372 = vmatpush1.msra.mxu0 0.0
  %1373 = vmatprep.subr.mxu0 0.0
  %1374 = vmatpush1.msra.mxu0 0.0
  %1375 = vmatprep.subr.mxu0 0.0
  %1376 = vmatpush1.msra.mxu0 0.0
  %1377 = vmatprep.subr.mxu0 0.0
  %1378 = vmatpush1.msra.mxu0 0.0
  %1379 = vmatprep.subr.mxu0 0.0
  %1380 = vmatpush1.msra.mxu0 0.0
  %1381 = vmatprep.subr.mxu0 0.0
  %1382 = vmatpush1.msra.mxu0 0.0
  %1383 = vmatprep.subr.mxu0 0.0
  %1384 = vmatpush1.msra.mxu0 0.0
  %1385 = vmatprep.subr.mxu0 0.0
  %1386 = vmatpush1.msra.mxu0 0.0
  %1387 = vmatprep.subr.mxu0 0.0
  %1388 = vmatpush1.msra.mxu0 %v32
  %1389 = vmatprep.subr.mxu0 0.0
  %1390 = vmatpush1.msra.mxu0 %v31
  %1391 = vmatprep.subr.mxu0 0.0
  %1392 = vmatpush1.msra.mxu0 %v30
  %1393 = vmatprep.subr.mxu0 0.0
  %1394 = vmatpush1.msra.mxu0 %v29
  %1395 = vmatprep.subr.mxu0 0.0
  %1396 = vmatpush2.msra.mxu0 0.0
  %1397 = vmatprep.subr.mxu0 0.0
  %1398 = vmatpush2.msra.mxu0 0.0
  %1399 = vmatprep.subr.mxu0 0.0
  %1400 = vmatpush2.msra.mxu0 0.0
  %1401 = vmatprep.subr.mxu0 0.0
  %1402 = vmatpush2.msra.mxu0 0.0
  %1403 = vmatprep.subr.mxu0 0.0
  %1404 = vmatpush2.msra.mxu0 0.0
  %1405 = vmatprep.subr.mxu0 0.0
  %1406 = vmatpush2.msra.mxu0 0.0
  %1407 = vmatprep.subr.mxu0 0.0
  %1408 = vmatpush2.msra.mxu0 0.0
  %1409 = vmatprep.subr.mxu0 0.0
  %1410 = vmatpush2.msra.mxu0 0.0
  %1411 = vmatprep.subr.mxu0 0.0
  %1412 = vmatpush2.msra.mxu0 0.0
  %1413 = vmatprep.subr.mxu0 0.0
  %1414 = vmatpush2.msra.mxu0 0.0
  %1415 = vmatprep.subr.mxu0 0.0
  %1416 = vmatpush2.msra.mxu0 0.0
  %1417 = vmatprep.subr.mxu0 0.0
  %1418 = vmatpush2.msra.mxu0 0.0
  %1419 = vmatprep.subr.mxu0 0.0
  %1420 = vmatpush2.msra.mxu0 0.0
  %1421 = vmatprep.subr.mxu0 0.0
  %1422 = vmatpush2.msra.mxu0 0.0
  %1423 = vmatprep.subr.mxu0 0.0
  %1424 = vmatpush2.msra.mxu0 0.0
  %1425 = vmatprep.subr.mxu0 0.0
  %1426 = vmatpush2.msra.mxu0 0.0
  %1427 = vmatprep.mubr.f32.mxu0 0.0
  %1428 = vmatmul.mubr.f32.gmra.mxu0 %v1282
  %v1429 = vpop.f32.mrf.mxu0
  %v1430 = vadd.f32 0.0, %v1429
  %v1431 = vpop.f32.mrf.mxu0
  %1432 = vdwg.mxu0
  %v1433 = vadd.f32 %v1362, %v1430
  %v1434 = vxor.u32 %v1433, 2147483648
  %v1435 = vmul.f32 %v1434, 1.442695
  %v1436 = vpow.pop %v1435
  %v1437 = vadd.f32 %v1436, 1.0
  %v1438 = vrcp.pop %v1437
  %v1439 = vmul.f32 1.0, %v1438
  %v1440 = vtanh.pop %v1433
  %v1441 = vmul.f32 %v1439, %v1272
  %1443 = vrot.lane.b32.xlu0 %v1440, 64
  %v1444 = vpop.permute.xlu0 %1443
  %v1446 = vmul.f32 %v1439, %v1444
  %1448 = vrot.lane.b32.xlu0 %v1446, 32
  %v1449 = vpop.permute.xlu0 %1448
  %v1451 = vadd.f32 %v1441, %v1449
  %v1452 = vtanh.pop %v1451
  %1454 = vrot.lane.b32.xlu0 %v1452, 64
  %v1455 = vpop.permute.xlu0 %1454
  %v1457 = vmul.f32 %v1439, %v1455
  %1459 = vrot.lane.b32.xlu0 %v1457, 32
  %v1460 = vpop.permute.xlu0 %1459
  %v1461 = vsel %vm293, %v1460, 0
  %1463 = vmatprep.subr.mxu0 0.0
  %1464 = vmatpush1.msra.mxu0 0.0
  %1465 = vmatprep.subr.mxu0 0.0
  %1466 = vmatpush1.msra.mxu0 0.0
  %1467 = vmatprep.subr.mxu0 0.0
  %1468 = vmatpush1.msra.mxu0 0.0
  %1469 = vmatprep.subr.mxu0 0.0
  %1470 = vmatpush1.msra.mxu0 0.0
  %1471 = vmatprep.subr.mxu0 0.0
  %1472 = vmatpush1.msra.mxu0 0.0
  %1473 = vmatprep.subr.mxu0 0.0
  %1474 = vmatpush1.msra.mxu0 0.0
  %1475 = vmatprep.subr.mxu0 0.0
  %1476 = vmatpush1.msra.mxu0 0.0
  %1477 = vmatprep.subr.mxu0 0.0
  %1478 = vmatpush1.msra.mxu0 0.0
  %1479 = vmatprep.subr.mxu0 0.0
  %1480 = vmatpush1.msra.mxu0 0.0
  %1481 = vmatprep.subr.mxu0 0.0
  %1482 = vmatpush1.msra.mxu0 0.0
  %1483 = vmatprep.subr.mxu0 0.0
  %1484 = vmatpush1.msra.mxu0 0.0
  %1485 = vmatprep.subr.mxu0 0.0
  %1486 = vmatpush1.msra.mxu0 0.0
  %1487 = vmatprep.subr.mxu0 0.0
  %1488 = vmatpush1.msra.mxu0 %v37
  %1489 = vmatprep.subr.mxu0 0.0
  %1490 = vmatpush1.msra.mxu0 %v36
  %1491 = vmatprep.subr.mxu0 0.0
  %1492 = vmatpush1.msra.mxu0 %v35
  %1493 = vmatprep.subr.mxu0 0.0
  %1494 = vmatpush1.msra.mxu0 %v34
  %1495 = vmatprep.subr.mxu0 0.0
  %1496 = vmatpush2.msra.mxu0 0.0
  %1497 = vmatprep.subr.mxu0 0.0
  %1498 = vmatpush2.msra.mxu0 0.0
  %1499 = vmatprep.subr.mxu0 0.0
  %1500 = vmatpush2.msra.mxu0 0.0
  %1501 = vmatprep.subr.mxu0 0.0
  %1502 = vmatpush2.msra.mxu0 0.0
  %1503 = vmatprep.subr.mxu0 0.0
  %1504 = vmatpush2.msra.mxu0 0.0
  %1505 = vmatprep.subr.mxu0 0.0
  %1506 = vmatpush2.msra.mxu0 0.0
  %1507 = vmatprep.subr.mxu0 0.0
  %1508 = vmatpush2.msra.mxu0 0.0
  %1509 = vmatprep.subr.mxu0 0.0
  %1510 = vmatpush2.msra.mxu0 0.0
  %1511 = vmatprep.subr.mxu0 0.0
  %1512 = vmatpush2.msra.mxu0 0.0
  %1513 = vmatprep.subr.mxu0 0.0
  %1514 = vmatpush2.msra.mxu0 0.0
  %1515 = vmatprep.subr.mxu0 0.0
  %1516 = vmatpush2.msra.mxu0 0.0
  %1517 = vmatprep.subr.mxu0 0.0
  %1518 = vmatpush2.msra.mxu0 0.0
  %1519 = vmatprep.subr.mxu0 0.0
  %1520 = vmatpush2.msra.mxu0 0.0
  %1521 = vmatprep.subr.mxu0 0.0
  %1522 = vmatpush2.msra.mxu0 0.0
  %1523 = vmatprep.subr.mxu0 0.0
  %1524 = vmatpush2.msra.mxu0 0.0
  %1525 = vmatprep.subr.mxu0 0.0
  %1526 = vmatpush2.msra.mxu0 0.0
  %1527 = vmatprep.mubr.f32.mxu0 0.0
  %1528 = vmatmul.mubr.f32.gmra.mxu0 %v1461
  %v1529 = vpop.f32.mrf.mxu0
  %v1530 = vadd.f32 %v1096, %v1529
  %v1531 = vpop.f32.mrf.mxu0
  %1532 = vdwg.mxu0
  %1533 = vst.msk [vmem:[%s7 + $0x8] sm:$0xff] %vm1354, %v1530
  %1535 = vset.pattern.permute.xlu0 0
  %1536 = vperm.xlu0 %1535, %v1530
  %v1537 = vpop.permute.xlu0 %1536
  %v1539 = vmul.f32 %v1537, %v1181
  %v1540 = vadd.f32 %v285, %v1539
  %1541 = vmatprep.subr.mxu0 0.0
  %1542 = vmatpush1.msra.mxu0 0.0
  %1543 = vmatprep.subr.mxu0 0.0
  %1544 = vmatpush1.msra.mxu0 0.0
  %1545 = vmatprep.subr.mxu0 0.0
  %1546 = vmatpush1.msra.mxu0 0.0
  %1547 = vmatprep.subr.mxu0 0.0
  %1548 = vmatpush1.msra.mxu0 0.0
  %1549 = vmatprep.subr.mxu0 0.0
  %1550 = vmatpush1.msra.mxu0 0.0
  %1551 = vmatprep.subr.mxu0 0.0
  %1552 = vmatpush1.msra.mxu0 0.0
  %1553 = vmatprep.subr.mxu0 0.0
  %1554 = vmatpush1.msra.mxu0 0.0
  %1555 = vmatprep.subr.mxu0 0.0
  %1556 = vmatpush1.msra.mxu0 0.0
  %1557 = vmatprep.subr.mxu0 0.0
  %1558 = vmatpush1.msra.mxu0 0.0
  %1559 = vmatprep.subr.mxu0 0.0
  %1560 = vmatpush1.msra.mxu0 0.0
  %1561 = vmatprep.subr.mxu0 0.0
  %1562 = vmatpush1.msra.mxu0 0.0
  %1563 = vmatprep.subr.mxu0 0.0
  %1564 = vmatpush1.msra.mxu0 0.0
  %1565 = vmatprep.subr.mxu0 0.0
  %1566 = vmatpush1.msra.mxu0 %v32
  %1567 = vmatprep.subr.mxu0 0.0
  %1568 = vmatpush1.msra.mxu0 %v31
  %1569 = vmatprep.subr.mxu0 0.0
  %1570 = vmatpush1.msra.mxu0 %v30
  %1571 = vmatprep.subr.mxu0 0.0
  %1572 = vmatpush1.msra.mxu0 %v29
  %1573 = vmatprep.subr.mxu0 0.0
  %1574 = vmatpush2.msra.mxu0 0.0
  %1575 = vmatprep.subr.mxu0 0.0
  %1576 = vmatpush2.msra.mxu0 0.0
  %1577 = vmatprep.subr.mxu0 0.0
  %1578 = vmatpush2.msra.mxu0 0.0
  %1579 = vmatprep.subr.mxu0 0.0
  %1580 = vmatpush2.msra.mxu0 0.0
  %1581 = vmatprep.subr.mxu0 0.0
  %1582 = vmatpush2.msra.mxu0 0.0
  %1583 = vmatprep.subr.mxu0 0.0
  %1584 = vmatpush2.msra.mxu0 0.0
  %1585 = vmatprep.subr.mxu0 0.0
  %1586 = vmatpush2.msra.mxu0 0.0
  %1587 = vmatprep.subr.mxu0 0.0
  %1588 = vmatpush2.msra.mxu0 0.0
  %1589 = vmatprep.subr.mxu0 0.0
  %1590 = vmatpush2.msra.mxu0 0.0
  %1591 = vmatprep.subr.mxu0 0.0
  %1592 = vmatpush2.msra.mxu0 0.0
  %1593 = vmatprep.subr.mxu0 0.0
  %1594 = vmatpush2.msra.mxu0 0.0
  %1595 = vmatprep.subr.mxu0 0.0
  %1596 = vmatpush2.msra.mxu0 0.0
  %1597 = vmatprep.subr.mxu0 0.0
  %1598 = vmatpush2.msra.mxu0 0.0
  %1599 = vmatprep.subr.mxu0 0.0
  %1600 = vmatpush2.msra.mxu0 0.0
  %1601 = vmatprep.subr.mxu0 0.0
  %1602 = vmatpush2.msra.mxu0 0.0
  %1603 = vmatprep.subr.mxu0 0.0
  %1604 = vmatpush2.msra.mxu0 0.0
  %1605 = vmatprep.mubr.f32.mxu0 0.0
  %1606 = vmatmul.mubr.f32.gmra.mxu0 %v1461
  %v1607 = vpop.f32.mrf.mxu0
  %v1608 = vadd.f32 0.0, %v1607
  %v1609 = vpop.f32.mrf.mxu0
  %1610 = vdwg.mxu0
  %v1611 = vadd.f32 %v1540, %v1608
  %v1612 = vxor.u32 %v1611, 2147483648
  %v1613 = vmul.f32 %v1612, 1.442695
  %v1614 = vpow.pop %v1613
  %v1615 = vadd.f32 %v1614, 1.0
  %v1616 = vrcp.pop %v1615
  %v1617 = vmul.f32 1.0, %v1616
  %v1618 = vtanh.pop %v1611
  %v1619 = vmul.f32 %v1617, %v1451
  %1621 = vrot.lane.b32.xlu0 %v1618, 64
  %v1622 = vpop.permute.xlu0 %1621
  %v1624 = vmul.f32 %v1617, %v1622
  %1626 = vrot.lane.b32.xlu0 %v1624, 32
  %v1627 = vpop.permute.xlu0 %1626
  %v1629 = vadd.f32 %v1619, %v1627
  %v1630 = vtanh.pop %v1629
  %1632 = vrot.lane.b32.xlu0 %v1630, 64
  %v1633 = vpop.permute.xlu0 %1632
  %v1635 = vmul.f32 %v1617, %v1633
  %1637 = vrot.lane.b32.xlu0 %v1635, 32
  %v1638 = vpop.permute.xlu0 %1637
  %v1639 = vsel %vm293, %v1638, 0
  %1641 = vmatprep.subr.mxu0 0.0
  %1642 = vmatpush1.msra.mxu0 0.0
  %1643 = vmatprep.subr.mxu0 0.0
  %1644 = vmatpush1.msra.mxu0 0.0
  %1645 = vmatprep.subr.mxu0 0.0
  %1646 = vmatpush1.msra.mxu0 0.0
  %1647 = vmatprep.subr.mxu0 0.0
  %1648 = vmatpush1.msra.mxu0 0.0
  %1649 = vmatprep.subr.mxu0 0.0
  %1650 = vmatpush1.msra.mxu0 0.0
  %1651 = vmatprep.subr.mxu0 0.0
  %1652 = vmatpush1.msra.mxu0 0.0
  %1653 = vmatprep.subr.mxu0 0.0
  %1654 = vmatpush1.msra.mxu0 0.0
  %1655 = vmatprep.subr.mxu0 0.0
  %1656 = vmatpush1.msra.mxu0 0.0
  %1657 = vmatprep.subr.mxu0 0.0
  %1658 = vmatpush1.msra.mxu0 0.0
  %1659 = vmatprep.subr.mxu0 0.0
  %1660 = vmatpush1.msra.mxu0 0.0
  %1661 = vmatprep.subr.mxu0 0.0
  %1662 = vmatpush1.msra.mxu0 0.0
  %1663 = vmatprep.subr.mxu0 0.0
  %1664 = vmatpush1.msra.mxu0 0.0
  %1665 = vmatprep.subr.mxu0 0.0
  %1666 = vmatpush1.msra.mxu0 %v37
  %1667 = vmatprep.subr.mxu0 0.0
  %1668 = vmatpush1.msra.mxu0 %v36
  %1669 = vmatprep.subr.mxu0 0.0
  %1670 = vmatpush1.msra.mxu0 %v35
  %1671 = vmatprep.subr.mxu0 0.0
  %1672 = vmatpush1.msra.mxu0 %v34
  %1673 = vmatprep.subr.mxu0 0.0
  %1674 = vmatpush2.msra.mxu0 0.0
  %1675 = vmatprep.subr.mxu0 0.0
  %1676 = vmatpush2.msra.mxu0 0.0
  %1677 = vmatprep.subr.mxu0 0.0
  %1678 = vmatpush2.msra.mxu0 0.0
  %1679 = vmatprep.subr.mxu0 0.0
  %1680 = vmatpush2.msra.mxu0 0.0
  %1681 = vmatprep.subr.mxu0 0.0
  %1682 = vmatpush2.msra.mxu0 0.0
  %1683 = vmatprep.subr.mxu0 0.0
  %1684 = vmatpush2.msra.mxu0 0.0
  %1685 = vmatprep.subr.mxu0 0.0
  %1686 = vmatpush2.msra.mxu0 0.0
  %1687 = vmatprep.subr.mxu0 0.0
  %1688 = vmatpush2.msra.mxu0 0.0
  %1689 = vmatprep.subr.mxu0 0.0
  %1690 = vmatpush2.msra.mxu0 0.0
  %1691 = vmatprep.subr.mxu0 0.0
  %1692 = vmatpush2.msra.mxu0 0.0
  %1693 = vmatprep.subr.mxu0 0.0
  %1694 = vmatpush2.msra.mxu0 0.0
  %1695 = vmatprep.subr.mxu0 0.0
  %1696 = vmatpush2.msra.mxu0 0.0
  %1697 = vmatprep.subr.mxu0 0.0
  %1698 = vmatpush2.msra.mxu0 0.0
  %1699 = vmatprep.subr.mxu0 0.0
  %1700 = vmatpush2.msra.mxu0 0.0
  %1701 = vmatprep.subr.mxu0 0.0
  %1702 = vmatpush2.msra.mxu0 0.0
  %1703 = vmatprep.subr.mxu0 0.0
  %1704 = vmatpush2.msra.mxu0 0.0
  %1705 = vmatprep.mubr.f32.mxu0 0.0
  %1706 = vmatmul.mubr.f32.gmra.mxu0 %v1639
  %v1707 = vpop.f32.mrf.mxu0
  %v1708 = vadd.f32 %v1096, %v1707
  %v1709 = vpop.f32.mrf.mxu0
  %1710 = vdwg.mxu0
  %1711 = vst.msk [vmem:[%s7 + $0x10] sm:$0xff] %vm1354, %v1708
  %1713 = vset.pattern.permute.xlu0 0
  %1714 = vperm.xlu0 %1713, %v1708
  %v1715 = vpop.permute.xlu0 %1714
  %v1717 = vmul.f32 %v1715, %v1181
  %v1718 = vadd.f32 %v290, %v1717
  %1719 = vmatprep.subr.mxu0 0.0
  %1720 = vmatpush1.msra.mxu0 0.0
  %1721 = vmatprep.subr.mxu0 0.0
  %1722 = vmatpush1.msra.mxu0 0.0
  %1723 = vmatprep.subr.mxu0 0.0
  %1724 = vmatpush1.msra.mxu0 0.0
  %1725 = vmatprep.subr.mxu0 0.0
  %1726 = vmatpush1.msra.mxu0 0.0
  %1727 = vmatprep.subr.mxu0 0.0
  %1728 = vmatpush1.msra.mxu0 0.0
  %1729 = vmatprep.subr.mxu0 0.0
  %1730 = vmatpush1.msra.mxu0 0.0
  %1731 = vmatprep.subr.mxu0 0.0
  %1732 = vmatpush1.msra.mxu0 0.0
  %1733 = vmatprep.subr.mxu0 0.0
  %1734 = vmatpush1.msra.mxu0 0.0
  %1735 = vmatprep.subr.mxu0 0.0
  %1736 = vmatpush1.msra.mxu0 0.0
  %1737 = vmatprep.subr.mxu0 0.0
  %1738 = vmatpush1.msra.mxu0 0.0
  %1739 = vmatprep.subr.mxu0 0.0
  %1740 = vmatpush1.msra.mxu0 0.0
  %1741 = vmatprep.subr.mxu0 0.0
  %1742 = vmatpush1.msra.mxu0 0.0
  %1743 = vmatprep.subr.mxu0 0.0
  %1744 = vmatpush1.msra.mxu0 %v32
  %1745 = vmatprep.subr.mxu0 0.0
  %1746 = vmatpush1.msra.mxu0 %v31
  %1747 = vmatprep.subr.mxu0 0.0
  %1748 = vmatpush1.msra.mxu0 %v30
  %1749 = vmatprep.subr.mxu0 0.0
  %1750 = vmatpush1.msra.mxu0 %v29
  %1751 = vmatprep.subr.mxu0 0.0
  %1752 = vmatpush2.msra.mxu0 0.0
  %1753 = vmatprep.subr.mxu0 0.0
  %1754 = vmatpush2.msra.mxu0 0.0
  %1755 = vmatprep.subr.mxu0 0.0
  %1756 = vmatpush2.msra.mxu0 0.0
  %1757 = vmatprep.subr.mxu0 0.0
  %1758 = vmatpush2.msra.mxu0 0.0
  %1759 = vmatprep.subr.mxu0 0.0
  %1760 = vmatpush2.msra.mxu0 0.0
  %1761 = vmatprep.subr.mxu0 0.0
  %1762 = vmatpush2.msra.mxu0 0.0
  %1763 = vmatprep.subr.mxu0 0.0
  %1764 = vmatpush2.msra.mxu0 0.0
  %1765 = vmatprep.subr.mxu0 0.0
  %1766 = vmatpush2.msra.mxu0 0.0
  %1767 = vmatprep.subr.mxu0 0.0
  %1768 = vmatpush2.msra.mxu0 0.0
  %1769 = vmatprep.subr.mxu0 0.0
  %1770 = vmatpush2.msra.mxu0 0.0
  %1771 = vmatprep.subr.mxu0 0.0
  %1772 = vmatpush2.msra.mxu0 0.0
  %1773 = vmatprep.subr.mxu0 0.0
  %1774 = vmatpush2.msra.mxu0 0.0
  %1775 = vmatprep.subr.mxu0 0.0
  %1776 = vmatpush2.msra.mxu0 0.0
  %1777 = vmatprep.subr.mxu0 0.0
  %1778 = vmatpush2.msra.mxu0 0.0
  %1779 = vmatprep.subr.mxu0 0.0
  %1780 = vmatpush2.msra.mxu0 0.0
  %1781 = vmatprep.subr.mxu0 0.0
  %1782 = vmatpush2.msra.mxu0 0.0
  %1783 = vmatprep.mubr.f32.mxu0 0.0
  %1784 = vmatmul.mubr.f32.gmra.mxu0 %v1639
  %v1785 = vpop.f32.mrf.mxu0
  %v1786 = vadd.f32 0.0, %v1785
  %v1787 = vpop.f32.mrf.mxu0
  %1788 = vdwg.mxu0
  %v1789 = vadd.f32 %v1718, %v1786
  %v1790 = vxor.u32 %v1789, 2147483648
  %v1791 = vmul.f32 %v1790, 1.442695
  %v1792 = vpow.pop %v1791
  %v1793 = vadd.f32 %v1792, 1.0
  %v1794 = vrcp.pop %v1793
  %v1795 = vmul.f32 1.0, %v1794
  %v1796 = vtanh.pop %v1789
  %v1797 = vmul.f32 %v1795, %v1629
  %1799 = vrot.lane.b32.xlu0 %v1796, 64
  %v1800 = vpop.permute.xlu0 %1799
  %v1802 = vmul.f32 %v1795, %v1800
  %1804 = vrot.lane.b32.xlu0 %v1802, 32
  %v1805 = vpop.permute.xlu0 %1804
  %v1807 = vadd.f32 %v1797, %v1805
  %v1808 = vtanh.pop %v1807
  %1810 = vrot.lane.b32.xlu0 %v1808, 64
  %v1811 = vpop.permute.xlu0 %1810
  %v1813 = vmul.f32 %v1795, %v1811
  %1815 = vrot.lane.b32.xlu0 %v1813, 32
  %v1816 = vpop.permute.xlu0 %1815
  %v1817 = vsel %vm293, %v1816, 0
  %1819 = vmatprep.subr.mxu0 0.0
  %1820 = vmatpush1.msra.mxu0 0.0
  %1821 = vmatprep.subr.mxu0 0.0
  %1822 = vmatpush1.msra.mxu0 0.0
  %1823 = vmatprep.subr.mxu0 0.0
  %1824 = vmatpush1.msra.mxu0 0.0
  %1825 = vmatprep.subr.mxu0 0.0
  %1826 = vmatpush1.msra.mxu0 0.0
  %1827 = vmatprep.subr.mxu0 0.0
  %1828 = vmatpush1.msra.mxu0 0.0
  %1829 = vmatprep.subr.mxu0 0.0
  %1830 = vmatpush1.msra.mxu0 0.0
  %1831 = vmatprep.subr.mxu0 0.0
  %1832 = vmatpush1.msra.mxu0 0.0
  %1833 = vmatprep.subr.mxu0 0.0
  %1834 = vmatpush1.msra.mxu0 0.0
  %1835 = vmatprep.subr.mxu0 0.0
  %1836 = vmatpush1.msra.mxu0 0.0
  %1837 = vmatprep.subr.mxu0 0.0
  %1838 = vmatpush1.msra.mxu0 0.0
  %1839 = vmatprep.subr.mxu0 0.0
  %1840 = vmatpush1.msra.mxu0 0.0
  %1841 = vmatprep.subr.mxu0 0.0
  %1842 = vmatpush1.msra.mxu0 0.0
  %1843 = vmatprep.subr.mxu0 0.0
  %1844 = vmatpush1.msra.mxu0 %v37
  %1845 = vmatprep.subr.mxu0 0.0
  %1846 = vmatpush1.msra.mxu0 %v36
  %1847 = vmatprep.subr.mxu0 0.0
  %1848 = vmatpush1.msra.mxu0 %v35
  %1849 = vmatprep.subr.mxu0 0.0
  %1850 = vmatpush1.msra.mxu0 %v34
  %1851 = vmatprep.subr.mxu0 0.0
  %1852 = vmatpush2.msra.mxu0 0.0
  %1853 = vmatprep.subr.mxu0 0.0
  %1854 = vmatpush2.msra.mxu0 0.0
  %1855 = vmatprep.subr.mxu0 0.0
  %1856 = vmatpush2.msra.mxu0 0.0
  %1857 = vmatprep.subr.mxu0 0.0
  %1858 = vmatpush2.msra.mxu0 0.0
  %1859 = vmatprep.subr.mxu0 0.0
  %1860 = vmatpush2.msra.mxu0 0.0
  %1861 = vmatprep.subr.mxu0 0.0
  %1862 = vmatpush2.msra.mxu0 0.0
  %1863 = vmatprep.subr.mxu0 0.0
  %1864 = vmatpush2.msra.mxu0 0.0
  %1865 = vmatprep.subr.mxu0 0.0
  %1866 = vmatpush2.msra.mxu0 0.0
  %1867 = vmatprep.subr.mxu0 0.0
  %1868 = vmatpush2.msra.mxu0 0.0
  %1869 = vmatprep.subr.mxu0 0.0
  %1870 = vmatpush2.msra.mxu0 0.0
  %1871 = vmatprep.subr.mxu0 0.0
  %1872 = vmatpush2.msra.mxu0 0.0
  %1873 = vmatprep.subr.mxu0 0.0
  %1874 = vmatpush2.msra.mxu0 0.0
  %1875 = vmatprep.subr.mxu0 0.0
  %1876 = vmatpush2.msra.mxu0 0.0
  %1877 = vmatprep.subr.mxu0 0.0
  %1878 = vmatpush2.msra.mxu0 0.0
  %1879 = vmatprep.subr.mxu0 0.0
  %1880 = vmatpush2.msra.mxu0 0.0
  %1881 = vmatprep.subr.mxu0 0.0
  %1882 = vmatpush2.msra.mxu0 0.0
  %1883 = vmatprep.mubr.f32.mxu0 0.0
  %1884 = vmatmul.mubr.f32.gmra.mxu0 %v1817
  %v1885 = vpop.f32.mrf.mxu0
  %v1886 = vadd.f32 %v1096, %v1885
  %v1887 = vpop.f32.mrf.mxu0
  %1888 = vdwg.mxu0
  %1889 = vst.msk [vmem:[%s7 + $0x18] sm:$0xff] %vm1354, %v1886
  // Predicated region
  $region30: #{simple_occ_lstm_forward.1} parent=0 // pred_check
    _
  $region31: #{simple_occ_lstm_forward.1} parent=0 // pred_check_branch
    %1891 = sbr.rel (0) target = $region33
  $region32: #{simple_occ_lstm_forward.1} parent=0 // pred_region
    _
  $region33: #{simple_occ_lstm_forward.1} parent=0 // pred_fallthru
    _
  // Predicated region
  $region34: #{simple_occ_lstm_forward.1} parent=0 // pred_check
    _
  $region35: #{simple_occ_lstm_forward.1} parent=0 // pred_check_branch
    %1893 = sbr.rel (0) target = $region37
  $region36: #{simple_occ_lstm_forward.1} parent=0 // pred_region
    _
  $region37: #{simple_occ_lstm_forward.1} parent=0 // pred_fallthru
    _

</llo_original>
